<compile_context>
chip_gen: v7x
topology: tpu7x:2x2x1
jax: 0.10.0
libtpu: 0.0.40
codegen_flags: <defaults>
</compile_context>

<pallas_src>
import functools

import jax
import jax.numpy as jnp
from jax.experimental import pallas as pl
from jax.experimental.pallas import tpu as pltpu


# ----------------------------------------------------------------------------
# Fused kernel: all heads' FusionMask + depthwise 3x3 reflect conv + softmax,
# one batch element per grid step.
# ----------------------------------------------------------------------------
def _fmg_kernel(x_ref, w_ref, b_ref, o_ref, pad_ref, *, heads, H, W, mu, sigma):
    # x_ref   : (heads, 1, 3, H, W)  input images for this batch element (VMEM)
    # w_ref   : (heads*9,)           depthwise 3x3 weights, flattened     (SMEM)
    # b_ref   : (heads,)             conv bias                            (SMEM)
    # o_ref   : (1, heads, H, W)     softmax masks
    # pad_ref : (H+2, W+2) f32       VMEM scratch, reused per head for padding
    inv_dem = 1.0 / (2.0 * sigma * sigma)
    col = jax.lax.broadcasted_iota(jnp.int32, (H, W), 1)
    row = jax.lax.broadcasted_iota(jnp.int32, (H, W), 0)

    pad_ref[...] = jnp.zeros_like(pad_ref)   # deterministic borders

    conv_outs = []
    for h in range(heads):                   # heads is small (static unroll)
        r = x_ref[h, 0, 0]
        g = x_ref[h, 0, 1]
        b = x_ref[h, 0, 2]

        # --- luminance (Rec.601) ---
        lum = 0.299 * r + 0.587 * g + 0.114 * b

        # --- gradient magnitude of luminance (forward differences, 0 at edge) ---
        pad_ref[1:H + 1, 1:W + 1] = lum
        lum_xp = pad_ref[1:H + 1, 2:W + 2]           # lum[i, j+1]
        lum_yp = pad_ref[2:H + 2, 1:W + 1]           # lum[i+1, j]
        dx = jnp.where(col < W - 1, lum_xp - lum, 0.0)
        dy = jnp.where(row < H - 1, lum_yp - lum, 0.0)
        t = jnp.sqrt(dx * dx + dy * dy)

        # --- saturation: per-pixel std over RGB ---
        mean = (r + g + b) * (1.0 / 3.0)
        var = ((r - mean) ** 2 + (g - mean) ** 2 + (b - mean) ** 2) * (1.0 / 3.0)
        s = jnp.sqrt(var)

        # --- well-exposedness ---
        d = lum - mu
        e = jnp.exp(-d * d * inv_dem)

        fm = t * s * e                               # FusionMask output (1 channel)

        # --- depthwise 3x3 conv, reflect pad 1, + bias (per-head filter) ---
        pad_ref[1:H + 1, 1:W + 1] = fm
        pad_ref[0:1, 1:W + 1] = fm[1:2, :]           # reflect rows
        pad_ref[H + 1:H + 2, 1:W + 1] = fm[H - 2:H - 1, :]
        pad_ref[:, 0:1] = pad_ref[:, 2:3]            # reflect cols (corners inherit)
        pad_ref[:, W + 1:W + 2] = pad_ref[:, W - 1:W]

        acc = None
        for kh in range(3):
            for kw in range(3):
                tap = pad_ref[kh:kh + H, kw:kw + W]
                wgt = w_ref[h * 9 + kh * 3 + kw]     # scalar from SMEM
                contrib = wgt * tap
                acc = contrib if acc is None else acc + contrib
        acc = acc + b_ref[h]
        conv_outs.append(acc)

    # --- softmax across heads ---
    m = conv_outs[0]
    for h in range(1, heads):
        m = jnp.maximum(m, conv_outs[h])
    exps = [jnp.exp(c - m) for c in conv_outs]
    den = exps[0]
    for h in range(1, heads):
        den = den + exps[h]
    inv = 1.0 / den
    for h in range(heads):
        o_ref[0, h] = (exps[h] * inv).astype(o_ref.dtype)


def feature_masks_generation(images, maskconv_w, maskconv_b, *, mu=0.5, sigma=0.2):
    """images: (heads, N, 3, H, W); maskconv_w: (heads, 1, 3, 3); maskconv_b: (heads,).

    Returns a tuple of `heads` arrays, each (N, 1, H, W), matching
    FeatureMasksGeneration.forward (shared=True, trainable=False).
    """
    heads, N, C, H, W = images.shape
    assert C == 3 and H >= 3 and W >= 3
    w_flat = maskconv_w.reshape(heads * 9).astype(jnp.float32)
    bias = maskconv_b.astype(jnp.float32)

    kernel = functools.partial(_fmg_kernel, heads=heads, H=H, W=W,
                               mu=float(mu), sigma=float(sigma))
    out = pl.pallas_call(
        kernel,
        out_shape=jax.ShapeDtypeStruct((N, heads, H, W), jnp.float32),
        grid_spec=pltpu.PrefetchScalarGridSpec(
            num_scalar_prefetch=0,
            grid=(N,),
            in_specs=[
                pl.BlockSpec((heads, 1, C, H, W), lambda n: (0, n, 0, 0, 0)),
                pl.BlockSpec(memory_space=pltpu.MemorySpace.SMEM),
                pl.BlockSpec(memory_space=pltpu.MemorySpace.SMEM),
            ],
            out_specs=pl.BlockSpec((1, heads, H, W), lambda n: (n, 0, 0, 0)),
            scratch_shapes=[pltpu.VMEM((H + 2, W + 2), jnp.float32)],
        ),
        compiler_params=pltpu.CompilerParams(dimension_semantics=("parallel",)),
    )(images.astype(jnp.float32), w_flat, bias)
    return tuple(out[:, h:h + 1] for h in range(heads))


# ----------------------------------------------------------------------------
# Pure-JAX reference (for correctness check)
# ----------------------------------------------------------------------------
def reference_forward(images, maskconv_w, maskconv_b, *, mu=0.5, sigma=0.2):
    heads, N, C, H, W = images.shape
    inv_dem = 1.0 / (2.0 * sigma * sigma)
    fms = []
    for h in range(heads):
        x = images[h].astype(jnp.float32)            # (N, 3, H, W)
        r, g, b = x[:, 0], x[:, 1], x[:, 2]
        lum = 0.299 * r + 0.587 * g + 0.114 * b
        dx = jnp.pad(lum[:, :, 1:] - lum[:, :, :-1], ((0, 0), (0, 0), (0, 1)))
        dy = jnp.pad(lum[:, 1:, :] - lum[:, :-1, :], ((0, 0), (0, 1), (0, 0)))
        t = jnp.sqrt(dx * dx + dy * dy)
        mean = (r + g + b) * (1.0 / 3.0)
        s = jnp.sqrt(((r - mean) ** 2 + (g - mean) ** 2 + (b - mean) ** 2) * (1.0 / 3.0))
        d = lum - mu
        e = jnp.exp(-d * d * inv_dem)
        fms.append(t * s * e)
    fm = jnp.stack(fms, axis=1)                                      # (N, heads, H, W)
    fm_p = jnp.pad(fm, ((0, 0), (0, 0), (1, 1), (1, 1)), mode="reflect")
    conv = jax.lax.conv_general_dilated(
        fm_p, maskconv_w.astype(jnp.float32),
        window_strides=(1, 1), padding="VALID",
        dimension_numbers=("NCHW", "OIHW", "NCHW"),
        feature_group_count=heads)
    conv = conv + maskconv_b[None, :, None, None]
    soft = jax.nn.softmax(conv, axis=1)
    return tuple(soft[:, h:h + 1] for h in range(heads))


if __name__ == "__main__":
    key = jax.random.PRNGKey(0)
    k_img, k_w, k_b = jax.random.split(key, 3)

    heads, N, C, H, W = 4, 2, 3, 16, 16
    images = jax.random.uniform(k_img, (heads, N, C, H, W), jnp.float32)   # RGB in [0,1]
    maskconv_w = jax.random.normal(k_w, (heads, 1, 3, 3), jnp.float32) * 0.5
    maskconv_b = jax.random.normal(k_b, (heads,), jnp.float32) * 0.1

    outs = feature_masks_generation(images, maskconv_w, maskconv_b)
    outs = jax.block_until_ready(outs)

    refs = reference_forward(images, maskconv_w, maskconv_b)
    assert len(outs) == heads == len(refs)
    for h in range(heads):
        assert outs[h].shape == (N, 1, H, W), outs[h].shape
        assert jnp.allclose(outs[h], refs[h], rtol=1e-3, atol=1e-3), (
            f"head {h} mismatch: max abs err "
            f"{float(jnp.max(jnp.abs(outs[h] - refs[h])))}")
    # softmax masks must sum to 1 over heads
    total = sum(outs)
    assert jnp.allclose(total, jnp.ones_like(total), rtol=1e-4, atol=1e-4)

    print("KERNEL_OK")
</pallas_src>

<mosaic_0001>
module attributes {stable_mosaic.version = 11 : i64} {
  func.func @_fmg_kernel(%arg0: i32, %arg1: memref<4x1x3x16x16xf32, #tpu.memory_space<vmem>>, %arg2: memref<36xf32, #tpu.memory_space<smem>>, %arg3: memref<4xf32, #tpu.memory_space<smem>>, %arg4: memref<1x4x16x16xf32, #tpu.memory_space<vmem>>, %arg5: memref<18x18xf32, #tpu.memory_space<vmem>>) attributes {dimension_semantics = [#tpu.dimension_semantics<parallel>], iteration_bounds = array<i64: 2>, scalar_prefetch = 0 : i64, scratch_operands = 1 : i64, tpu.core_type = #tpu.core_type<tc>, window_params = [{transform_indices = @transform_0, window_bounds = array<i64: 4, 1, 3, 16, 16>}, {transform_indices = @transform_1, window_bounds = array<i64: 36>}, {transform_indices = @transform_2, window_bounds = array<i64: 4>}, {transform_indices = @transform_3, window_bounds = array<i64: 1, 4, 16, 16>}]} {
    %0 = tpu.iota {dimensions = array<i32: 1>} : vector<16x16xi32>
    %1 = tpu.iota {dimensions = array<i32: 0>} : vector<16x16xi32>
    %cst = arith.constant 0.000000e+00 : f32
    %2 = vector.broadcast %cst : f32 to vector<18x18xf32>
    %c0 = arith.constant 0 : index
    %c0_0 = arith.constant 0 : index
    %3 = vector.load %arg5[%c0, %c0_0] : memref<18x18xf32, #tpu.memory_space<vmem>>, vector<18x18xf32>
    tpu.vector_store %arg5[%c0, %c0_0], %2 {strides = array<i32>} : memref<18x18xf32, #tpu.memory_space<vmem>>, vector<18x18xf32>,
    %c0_1 = arith.constant 0 : index
    %c0_2 = arith.constant 0 : index
    %c0_3 = arith.constant 0 : index
    %c0_4 = arith.constant 0 : index
    %c0_5 = arith.constant 0 : index
    %4 = vector.load %arg1[%c0_1, %c0_2, %c0_3, %c0_4, %c0_5] : memref<4x1x3x16x16xf32, #tpu.memory_space<vmem>>, vector<1x1x1x16x16xf32>
    %5 = vector.shape_cast %4 : vector<1x1x1x16x16xf32> to vector<16x16xf32>
    %c0_6 = arith.constant 0 : index
    %c0_7 = arith.constant 0 : index
    %c1 = arith.constant 1 : index
    %c0_8 = arith.constant 0 : index
    %c0_9 = arith.constant 0 : index
    %6 = vector.load %arg1[%c0_6, %c0_7, %c1, %c0_8, %c0_9] : memref<4x1x3x16x16xf32, #tpu.memory_space<vmem>>, vector<1x1x1x16x16xf32>
    %7 = vector.shape_cast %6 : vector<1x1x1x16x16xf32> to vector<16x16xf32>
    %c0_10 = arith.constant 0 : index
    %c0_11 = arith.constant 0 : index
    %c2 = arith.constant 2 : index
    %c0_12 = arith.constant 0 : index
    %c0_13 = arith.constant 0 : index
    %8 = vector.load %arg1[%c0_10, %c0_11, %c2, %c0_12, %c0_13] : memref<4x1x3x16x16xf32, #tpu.memory_space<vmem>>, vector<1x1x1x16x16xf32>
    %9 = vector.shape_cast %8 : vector<1x1x1x16x16xf32> to vector<16x16xf32>
    %cst_14 = arith.constant 2.990000e-01 : f32
    %10 = vector.broadcast %cst_14 : f32 to vector<16x16xf32>
    %11 = arith.mulf %10, %5 : vector<16x16xf32>
    %cst_15 = arith.constant 5.870000e-01 : f32
    %12 = vector.broadcast %cst_15 : f32 to vector<16x16xf32>
    %13 = arith.mulf %12, %7 : vector<16x16xf32>
    %14 = arith.addf %11, %13 : vector<16x16xf32>
    %cst_16 = arith.constant 1.140000e-01 : f32
    %15 = vector.broadcast %cst_16 : f32 to vector<16x16xf32>
    %16 = arith.mulf %15, %9 : vector<16x16xf32>
    %17 = arith.addf %14, %16 : vector<16x16xf32>
    %c1_17 = arith.constant 1 : index
    %c1_18 = arith.constant 1 : index
    %18 = vector.load %arg5[%c1_17, %c1_18] : memref<18x18xf32, #tpu.memory_space<vmem>>, vector<16x16xf32>
    tpu.vector_store %arg5[%c1_17, %c1_18], %17 {strides = array<i32>} : memref<18x18xf32, #tpu.memory_space<vmem>>, vector<16x16xf32>,
    %c1_19 = arith.constant 1 : index
    %c2_20 = arith.constant 2 : index
    %19 = vector.load %arg5[%c1_19, %c2_20] : memref<18x18xf32, #tpu.memory_space<vmem>>, vector<16x16xf32>
    %c2_21 = arith.constant 2 : index
    %c1_22 = arith.constant 1 : index
    %20 = vector.load %arg5[%c2_21, %c1_22] : memref<18x18xf32, #tpu.memory_space<vmem>>, vector<16x16xf32>
    %c15_i32 = arith.constant 15 : i32
    %21 = vector.broadcast %c15_i32 : i32 to vector<16x16xi32>
    %22 = arith.cmpi slt, %0, %21 : vector<16x16xi32>
    %23 = arith.subf %19, %17 : vector<16x16xf32>
    %cst_23 = arith.constant 0.000000e+00 : f32
    %24 = vector.broadcast %cst_23 : f32 to vector<16x16xf32>
    %25 = arith.select %22, %23, %24 : vector<16x16xi1>, vector<16x16xf32>
    %c15_i32_24 = arith.constant 15 : i32
    %26 = vector.broadcast %c15_i32_24 : i32 to vector<16x16xi32>
    %27 = arith.cmpi slt, %1, %26 : vector<16x16xi32>
    %28 = arith.subf %20, %17 : vector<16x16xf32>
    %cst_25 = arith.constant 0.000000e+00 : f32
    %29 = vector.broadcast %cst_25 : f32 to vector<16x16xf32>
    %30 = arith.select %27, %28, %29 : vector<16x16xi1>, vector<16x16xf32>
    %31 = arith.mulf %25, %25 : vector<16x16xf32>
    %32 = arith.mulf %30, %30 : vector<16x16xf32>
    %33 = arith.addf %31, %32 : vector<16x16xf32>
    %34 = math.sqrt %33 : vector<16x16xf32>
    %35 = arith.addf %5, %7 : vector<16x16xf32>
    %36 = arith.addf %35, %9 : vector<16x16xf32>
    %cst_26 = arith.constant 0.333333343 : f32
    %37 = vector.broadcast %cst_26 : f32 to vector<16x16xf32>
    %38 = arith.mulf %36, %37 : vector<16x16xf32>
    %39 = arith.subf %5, %38 : vector<16x16xf32>
    %40 = arith.mulf %39, %39 : vector<16x16xf32>
    %41 = arith.subf %7, %38 : vector<16x16xf32>
    %42 = arith.mulf %41, %41 : vector<16x16xf32>
    %43 = arith.addf %40, %42 : vector<16x16xf32>
    %44 = arith.subf %9, %38 : vector<16x16xf32>
    %45 = arith.mulf %44, %44 : vector<16x16xf32>
    %46 = arith.addf %43, %45 : vector<16x16xf32>
    %cst_27 = arith.constant 0.333333343 : f32
    %47 = vector.broadcast %cst_27 : f32 to vector<16x16xf32>
    %48 = arith.mulf %46, %47 : vector<16x16xf32>
    %49 = math.sqrt %48 : vector<16x16xf32>
    %cst_28 = arith.constant 5.000000e-01 : f32
    %50 = vector.broadcast %cst_28 : f32 to vector<16x16xf32>
    %51 = arith.subf %17, %50 : vector<16x16xf32>
    %cst_29 = arith.constant 0.000000e+00 : f32
    %52 = vector.broadcast %cst_29 : f32 to vector<16x16xf32>
    %53 = arith.subf %52, %51 : vector<16x16xf32>
    %54 = arith.mulf %53, %51 : vector<16x16xf32>
    %cst_30 = arith.constant 1.250000e+01 : f32
    %55 = vector.broadcast %cst_30 : f32 to vector<16x16xf32>
    %56 = arith.mulf %54, %55 : vector<16x16xf32>
    %57 = math.exp %56 : vector<16x16xf32>
    %58 = arith.mulf %34, %49 : vector<16x16xf32>
    %59 = arith.mulf %58, %57 : vector<16x16xf32>
    %c1_31 = arith.constant 1 : index
    %c1_32 = arith.constant 1 : index
    %60 = vector.load %arg5[%c1_31, %c1_32] : memref<18x18xf32, #tpu.memory_space<vmem>>, vector<16x16xf32>
    tpu.vector_store %arg5[%c1_31, %c1_32], %59 {strides = array<i32>} : memref<18x18xf32, #tpu.memory_space<vmem>>, vector<16x16xf32>,
    %61 = vector.extract_strided_slice %59 {offsets = [1, 0], sizes = [1, 16], strides = [1, 1]} : vector<16x16xf32> to vector<1x16xf32>
    %c0_33 = arith.constant 0 : index
    %c1_34 = arith.constant 1 : index
    %62 = vector.load %arg5[%c0_33, %c1_34] : memref<18x18xf32, #tpu.memory_space<vmem>>, vector<1x16xf32>
    tpu.vector_store %arg5[%c0_33, %c1_34], %61 {strides = array<i32>} : memref<18x18xf32, #tpu.memory_space<vmem>>, vector<1x16xf32>,
    %63 = vector.extract_strided_slice %59 {offsets = [14, 0], sizes = [1, 16], strides = [1, 1]} : vector<16x16xf32> to vector<1x16xf32>
    %c17 = arith.constant 17 : index
    %c1_35 = arith.constant 1 : index
    %64 = vector.load %arg5[%c17, %c1_35] : memref<18x18xf32, #tpu.memory_space<vmem>>, vector<1x16xf32>
    tpu.vector_store %arg5[%c17, %c1_35], %63 {strides = array<i32>} : memref<18x18xf32, #tpu.memory_space<vmem>>, vector<1x16xf32>,
    %c0_36 = arith.constant 0 : index
    %c2_37 = arith.constant 2 : index
    %65 = vector.load %arg5[%c0_36, %c2_37] : memref<18x18xf32, #tpu.memory_space<vmem>>, vector<18x1xf32>
    %c0_38 = arith.constant 0 : index
    %c0_39 = arith.constant 0 : index
    %66 = vector.load %arg5[%c0_38, %c0_39] : memref<18x18xf32, #tpu.memory_space<vmem>>, vector<18x1xf32>
    tpu.vector_store %arg5[%c0_38, %c0_39], %65 {strides = array<i32>} : memref<18x18xf32, #tpu.memory_space<vmem>>, vector<18x1xf32>,
    %c0_40 = arith.constant 0 : index
    %c15 = arith.constant 15 : index
    %67 = vector.load %arg5[%c0_40, %c15] : memref<18x18xf32, #tpu.memory_space<vmem>>, vector<18x1xf32>
    %c0_41 = arith.constant 0 : index
    %c17_42 = arith.constant 17 : index
    %68 = vector.load %arg5[%c0_41, %c17_42] : memref<18x18xf32, #tpu.memory_space<vmem>>, vector<18x1xf32>
    tpu.vector_store %arg5[%c0_41, %c17_42], %67 {strides = array<i32>} : memref<18x18xf32, #tpu.memory_space<vmem>>, vector<18x1xf32>,
    %c0_43 = arith.constant 0 : index
    %c0_44 = arith.constant 0 : index
    %69 = vector.load %arg5[%c0_43, %c0_44] : memref<18x18xf32, #tpu.memory_space<vmem>>, vector<16x16xf32>
    %c0_45 = arith.constant 0 : index
    %70 = memref.load %arg2[%c0_45] : memref<36xf32, #tpu.memory_space<smem>>
    %71 = vector.broadcast %70 : f32 to vector<16x16xf32>
    %72 = arith.mulf %71, %69 : vector<16x16xf32>
    %c0_46 = arith.constant 0 : index
    %c1_47 = arith.constant 1 : index
    %73 = vector.load %arg5[%c0_46, %c1_47] : memref<18x18xf32, #tpu.memory_space<vmem>>, vector<16x16xf32>
    %c1_48 = arith.constant 1 : index
    %74 = memref.load %arg2[%c1_48] : memref<36xf32, #tpu.memory_space<smem>>
    %75 = vector.broadcast %74 : f32 to vector<16x16xf32>
    %76 = arith.mulf %75, %73 : vector<16x16xf32>
    %77 = arith.addf %72, %76 : vector<16x16xf32>
    %c0_49 = arith.constant 0 : index
    %c2_50 = arith.constant 2 : index
    %78 = vector.load %arg5[%c0_49, %c2_50] : memref<18x18xf32, #tpu.memory_space<vmem>>, vector<16x16xf32>
    %c2_51 = arith.constant 2 : index
    %79 = memref.load %arg2[%c2_51] : memref<36xf32, #tpu.memory_space<smem>>
    %80 = vector.broadcast %79 : f32 to vector<16x16xf32>
    %81 = arith.mulf %80, %78 : vector<16x16xf32>
    %82 = arith.addf %77, %81 : vector<16x16xf32>
    %c1_52 = arith.constant 1 : index
    %c0_53 = arith.constant 0 : index
    %83 = vector.load %arg5[%c1_52, %c0_53] : memref<18x18xf32, #tpu.memory_space<vmem>>, vector<16x16xf32>
    %c3 = arith.constant 3 : index
    %84 = memref.load %arg2[%c3] : memref<36xf32, #tpu.memory_space<smem>>
    %85 = vector.broadcast %84 : f32 to vector<16x16xf32>
    %86 = arith.mulf %85, %83 : vector<16x16xf32>
    %87 = arith.addf %82, %86 : vector<16x16xf32>
    %c1_54 = arith.constant 1 : index
    %c1_55 = arith.constant 1 : index
    %88 = vector.load %arg5[%c1_54, %c1_55] : memref<18x18xf32, #tpu.memory_space<vmem>>, vector<16x16xf32>
    %c4 = arith.constant 4 : index
    %89 = memref.load %arg2[%c4] : memref<36xf32, #tpu.memory_space<smem>>
    %90 = vector.broadcast %89 : f32 to vector<16x16xf32>
    %91 = arith.mulf %90, %88 : vector<16x16xf32>
    %92 = arith.addf %87, %91 : vector<16x16xf32>
    %c1_56 = arith.constant 1 : index
    %c2_57 = arith.constant 2 : index
    %93 = vector.load %arg5[%c1_56, %c2_57] : memref<18x18xf32, #tpu.memory_space<vmem>>, vector<16x16xf32>
    %c5 = arith.constant 5 : index
    %94 = memref.load %arg2[%c5] : memref<36xf32, #tpu.memory_space<smem>>
    %95 = vector.broadcast %94 : f32 to vector<16x16xf32>
    %96 = arith.mulf %95, %93 : vector<16x16xf32>
    %97 = arith.addf %92, %96 : vector<16x16xf32>
    %c2_58 = arith.constant 2 : index
    %c0_59 = arith.constant 0 : index
    %98 = vector.load %arg5[%c2_58, %c0_59] : memref<18x18xf32, #tpu.memory_space<vmem>>, vector<16x16xf32>
    %c6 = arith.constant 6 : index
    %99 = memref.load %arg2[%c6] : memref<36xf32, #tpu.memory_space<smem>>
    %100 = vector.broadcast %99 : f32 to vector<16x16xf32>
    %101 = arith.mulf %100, %98 : vector<16x16xf32>
    %102 = arith.addf %97, %101 : vector<16x16xf32>
    %c2_60 = arith.constant 2 : index
    %c1_61 = arith.constant 1 : index
    %103 = vector.load %arg5[%c2_60, %c1_61] : memref<18x18xf32, #tpu.memory_space<vmem>>, vector<16x16xf32>
    %c7 = arith.constant 7 : index
    %104 = memref.load %arg2[%c7] : memref<36xf32, #tpu.memory_space<smem>>
    %105 = vector.broadcast %104 : f32 to vector<16x16xf32>
    %106 = arith.mulf %105, %103 : vector<16x16xf32>
    %107 = arith.addf %102, %106 : vector<16x16xf32>
    %c2_62 = arith.constant 2 : index
    %c2_63 = arith.constant 2 : index
    %108 = vector.load %arg5[%c2_62, %c2_63] : memref<18x18xf32, #tpu.memory_space<vmem>>, vector<16x16xf32>
    %c8 = arith.constant 8 : index
    %109 = memref.load %arg2[%c8] : memref<36xf32, #tpu.memory_space<smem>>
    %110 = vector.broadcast %109 : f32 to vector<16x16xf32>
    %111 = arith.mulf %110, %108 : vector<16x16xf32>
    %112 = arith.addf %107, %111 : vector<16x16xf32>
    %c0_64 = arith.constant 0 : index
    %113 = memref.load %arg3[%c0_64] : memref<4xf32, #tpu.memory_space<smem>>
    %114 = vector.broadcast %113 : f32 to vector<16x16xf32>
    %115 = arith.addf %112, %114 : vector<16x16xf32>
    %c1_65 = arith.constant 1 : index
    %c0_66 = arith.constant 0 : index
    %c0_67 = arith.constant 0 : index
    %c0_68 = arith.constant 0 : index
    %c0_69 = arith.constant 0 : index
    %116 = vector.load %arg1[%c1_65, %c0_66, %c0_67, %c0_68, %c0_69] : memref<4x1x3x16x16xf32, #tpu.memory_space<vmem>>, vector<1x1x1x16x16xf32>
    %117 = vector.shape_cast %116 : vector<1x1x1x16x16xf32> to vector<16x16xf32>
    %c1_70 = arith.constant 1 : index
    %c0_71 = arith.constant 0 : index
    %c1_72 = arith.constant 1 : index
    %c0_73 = arith.constant 0 : index
    %c0_74 = arith.constant 0 : index
    %118 = vector.load %arg1[%c1_70, %c0_71, %c1_72, %c0_73, %c0_74] : memref<4x1x3x16x16xf32, #tpu.memory_space<vmem>>, vector<1x1x1x16x16xf32>
    %119 = vector.shape_cast %118 : vector<1x1x1x16x16xf32> to vector<16x16xf32>
    %c1_75 = arith.constant 1 : index
    %c0_76 = arith.constant 0 : index
    %c2_77 = arith.constant 2 : index
    %c0_78 = arith.constant 0 : index
    %c0_79 = arith.constant 0 : index
    %120 = vector.load %arg1[%c1_75, %c0_76, %c2_77, %c0_78, %c0_79] : memref<4x1x3x16x16xf32, #tpu.memory_space<vmem>>, vector<1x1x1x16x16xf32>
    %121 = vector.shape_cast %120 : vector<1x1x1x16x16xf32> to vector<16x16xf32>
    %cst_80 = arith.constant 2.990000e-01 : f32
    %122 = vector.broadcast %cst_80 : f32 to vector<16x16xf32>
    %123 = arith.mulf %122, %117 : vector<16x16xf32>
    %cst_81 = arith.constant 5.870000e-01 : f32
    %124 = vector.broadcast %cst_81 : f32 to vector<16x16xf32>
    %125 = arith.mulf %124, %119 : vector<16x16xf32>
    %126 = arith.addf %123, %125 : vector<16x16xf32>
    %cst_82 = arith.constant 1.140000e-01 : f32
    %127 = vector.broadcast %cst_82 : f32 to vector<16x16xf32>
    %128 = arith.mulf %127, %121 : vector<16x16xf32>
    %129 = arith.addf %126, %128 : vector<16x16xf32>
    %c1_83 = arith.constant 1 : index
    %c1_84 = arith.constant 1 : index
    %130 = vector.load %arg5[%c1_83, %c1_84] : memref<18x18xf32, #tpu.memory_space<vmem>>, vector<16x16xf32>
    tpu.vector_store %arg5[%c1_83, %c1_84], %129 {strides = array<i32>} : memref<18x18xf32, #tpu.memory_space<vmem>>, vector<16x16xf32>,
    %c1_85 = arith.constant 1 : index
    %c2_86 = arith.constant 2 : index
    %131 = vector.load %arg5[%c1_85, %c2_86] : memref<18x18xf32, #tpu.memory_space<vmem>>, vector<16x16xf32>
    %c2_87 = arith.constant 2 : index
    %c1_88 = arith.constant 1 : index
    %132 = vector.load %arg5[%c2_87, %c1_88] : memref<18x18xf32, #tpu.memory_space<vmem>>, vector<16x16xf32>
    %c15_i32_89 = arith.constant 15 : i32
    %133 = vector.broadcast %c15_i32_89 : i32 to vector<16x16xi32>
    %134 = arith.cmpi slt, %0, %133 : vector<16x16xi32>
    %135 = arith.subf %131, %129 : vector<16x16xf32>
    %cst_90 = arith.constant 0.000000e+00 : f32
    %136 = vector.broadcast %cst_90 : f32 to vector<16x16xf32>
    %137 = arith.select %134, %135, %136 : vector<16x16xi1>, vector<16x16xf32>
    %c15_i32_91 = arith.constant 15 : i32
    %138 = vector.broadcast %c15_i32_91 : i32 to vector<16x16xi32>
    %139 = arith.cmpi slt, %1, %138 : vector<16x16xi32>
    %140 = arith.subf %132, %129 : vector<16x16xf32>
    %cst_92 = arith.constant 0.000000e+00 : f32
    %141 = vector.broadcast %cst_92 : f32 to vector<16x16xf32>
    %142 = arith.select %139, %140, %141 : vector<16x16xi1>, vector<16x16xf32>
    %143 = arith.mulf %137, %137 : vector<16x16xf32>
    %144 = arith.mulf %142, %142 : vector<16x16xf32>
    %145 = arith.addf %143, %144 : vector<16x16xf32>
    %146 = math.sqrt %145 : vector<16x16xf32>
    %147 = arith.addf %117, %119 : vector<16x16xf32>
    %148 = arith.addf %147, %121 : vector<16x16xf32>
    %cst_93 = arith.constant 0.333333343 : f32
    %149 = vector.broadcast %cst_93 : f32 to vector<16x16xf32>
    %150 = arith.mulf %148, %149 : vector<16x16xf32>
    %151 = arith.subf %117, %150 : vector<16x16xf32>
    %152 = arith.mulf %151, %151 : vector<16x16xf32>
    %153 = arith.subf %119, %150 : vector<16x16xf32>
    %154 = arith.mulf %153, %153 : vector<16x16xf32>
    %155 = arith.addf %152, %154 : vector<16x16xf32>
    %156 = arith.subf %121, %150 : vector<16x16xf32>
    %157 = arith.mulf %156, %156 : vector<16x16xf32>
    %158 = arith.addf %155, %157 : vector<16x16xf32>
    %cst_94 = arith.constant 0.333333343 : f32
    %159 = vector.broadcast %cst_94 : f32 to vector<16x16xf32>
    %160 = arith.mulf %158, %159 : vector<16x16xf32>
    %161 = math.sqrt %160 : vector<16x16xf32>
    %cst_95 = arith.constant 5.000000e-01 : f32
    %162 = vector.broadcast %cst_95 : f32 to vector<16x16xf32>
    %163 = arith.subf %129, %162 : vector<16x16xf32>
    %cst_96 = arith.constant 0.000000e+00 : f32
    %164 = vector.broadcast %cst_96 : f32 to vector<16x16xf32>
    %165 = arith.subf %164, %163 : vector<16x16xf32>
    %166 = arith.mulf %165, %163 : vector<16x16xf32>
    %cst_97 = arith.constant 1.250000e+01 : f32
    %167 = vector.broadcast %cst_97 : f32 to vector<16x16xf32>
    %168 = arith.mulf %166, %167 : vector<16x16xf32>
    %169 = math.exp %168 : vector<16x16xf32>
    %170 = arith.mulf %146, %161 : vector<16x16xf32>
    %171 = arith.mulf %170, %169 : vector<16x16xf32>
    %c1_98 = arith.constant 1 : index
    %c1_99 = arith.constant 1 : index
    %172 = vector.load %arg5[%c1_98, %c1_99] : memref<18x18xf32, #tpu.memory_space<vmem>>, vector<16x16xf32>
    tpu.vector_store %arg5[%c1_98, %c1_99], %171 {strides = array<i32>} : memref<18x18xf32, #tpu.memory_space<vmem>>, vector<16x16xf32>,
    %173 = vector.extract_strided_slice %171 {offsets = [1, 0], sizes = [1, 16], strides = [1, 1]} : vector<16x16xf32> to vector<1x16xf32>
    %c0_100 = arith.constant 0 : index
    %c1_101 = arith.constant 1 : index
    %174 = vector.load %arg5[%c0_100, %c1_101] : memref<18x18xf32, #tpu.memory_space<vmem>>, vector<1x16xf32>
    tpu.vector_store %arg5[%c0_100, %c1_101], %173 {strides = array<i32>} : memref<18x18xf32, #tpu.memory_space<vmem>>, vector<1x16xf32>,
    %175 = vector.extract_strided_slice %171 {offsets = [14, 0], sizes = [1, 16], strides = [1, 1]} : vector<16x16xf32> to vector<1x16xf32>
    %c17_102 = arith.constant 17 : index
    %c1_103 = arith.constant 1 : index
    %176 = vector.load %arg5[%c17_102, %c1_103] : memref<18x18xf32, #tpu.memory_space<vmem>>, vector<1x16xf32>
    tpu.vector_store %arg5[%c17_102, %c1_103], %175 {strides = array<i32>} : memref<18x18xf32, #tpu.memory_space<vmem>>, vector<1x16xf32>,
    %c0_104 = arith.constant 0 : index
    %c2_105 = arith.constant 2 : index
    %177 = vector.load %arg5[%c0_104, %c2_105] : memref<18x18xf32, #tpu.memory_space<vmem>>, vector<18x1xf32>
    %c0_106 = arith.constant 0 : index
    %c0_107 = arith.constant 0 : index
    %178 = vector.load %arg5[%c0_106, %c0_107] : memref<18x18xf32, #tpu.memory_space<vmem>>, vector<18x1xf32>
    tpu.vector_store %arg5[%c0_106, %c0_107], %177 {strides = array<i32>} : memref<18x18xf32, #tpu.memory_space<vmem>>, vector<18x1xf32>,
    %c0_108 = arith.constant 0 : index
    %c15_109 = arith.constant 15 : index
    %179 = vector.load %arg5[%c0_108, %c15_109] : memref<18x18xf32, #tpu.memory_space<vmem>>, vector<18x1xf32>
    %c0_110 = arith.constant 0 : index
    %c17_111 = arith.constant 17 : index
    %180 = vector.load %arg5[%c0_110, %c17_111] : memref<18x18xf32, #tpu.memory_space<vmem>>, vector<18x1xf32>
    tpu.vector_store %arg5[%c0_110, %c17_111], %179 {strides = array<i32>} : memref<18x18xf32, #tpu.memory_space<vmem>>, vector<18x1xf32>,
    %c0_112 = arith.constant 0 : index
    %c0_113 = arith.constant 0 : index
    %181 = vector.load %arg5[%c0_112, %c0_113] : memref<18x18xf32, #tpu.memory_space<vmem>>, vector<16x16xf32>
    %c9 = arith.constant 9 : index
    %182 = memref.load %arg2[%c9] : memref<36xf32, #tpu.memory_space<smem>>
    %183 = vector.broadcast %182 : f32 to vector<16x16xf32>
    %184 = arith.mulf %183, %181 : vector<16x16xf32>
    %c0_114 = arith.constant 0 : index
    %c1_115 = arith.constant 1 : index
    %185 = vector.load %arg5[%c0_114, %c1_115] : memref<18x18xf32, #tpu.memory_space<vmem>>, vector<16x16xf32>
    %c10 = arith.constant 10 : index
    %186 = memref.load %arg2[%c10] : memref<36xf32, #tpu.memory_space<smem>>
    %187 = vector.broadcast %186 : f32 to vector<16x16xf32>
    %188 = arith.mulf %187, %185 : vector<16x16xf32>
    %189 = arith.addf %184, %188 : vector<16x16xf32>
    %c0_116 = arith.constant 0 : index
    %c2_117 = arith.constant 2 : index
    %190 = vector.load %arg5[%c0_116, %c2_117] : memref<18x18xf32, #tpu.memory_space<vmem>>, vector<16x16xf32>
    %c11 = arith.constant 11 : index
    %191 = memref.load %arg2[%c11] : memref<36xf32, #tpu.memory_space<smem>>
    %192 = vector.broadcast %191 : f32 to vector<16x16xf32>
    %193 = arith.mulf %192, %190 : vector<16x16xf32>
    %194 = arith.addf %189, %193 : vector<16x16xf32>
    %c1_118 = arith.constant 1 : index
    %c0_119 = arith.constant 0 : index
    %195 = vector.load %arg5[%c1_118, %c0_119] : memref<18x18xf32, #tpu.memory_space<vmem>>, vector<16x16xf32>
    %c12 = arith.constant 12 : index
    %196 = memref.load %arg2[%c12] : memref<36xf32, #tpu.memory_space<smem>>
    %197 = vector.broadcast %196 : f32 to vector<16x16xf32>
    %198 = arith.mulf %197, %195 : vector<16x16xf32>
    %199 = arith.addf %194, %198 : vector<16x16xf32>
    %c1_120 = arith.constant 1 : index
    %c1_121 = arith.constant 1 : index
    %200 = vector.load %arg5[%c1_120, %c1_121] : memref<18x18xf32, #tpu.memory_space<vmem>>, vector<16x16xf32>
    %c13 = arith.constant 13 : index
    %201 = memref.load %arg2[%c13] : memref<36xf32, #tpu.memory_space<smem>>
    %202 = vector.broadcast %201 : f32 to vector<16x16xf32>
    %203 = arith.mulf %202, %200 : vector<16x16xf32>
    %204 = arith.addf %199, %203 : vector<16x16xf32>
    %c1_122 = arith.constant 1 : index
    %c2_123 = arith.constant 2 : index
    %205 = vector.load %arg5[%c1_122, %c2_123] : memref<18x18xf32, #tpu.memory_space<vmem>>, vector<16x16xf32>
    %c14 = arith.constant 14 : index
    %206 = memref.load %arg2[%c14] : memref<36xf32, #tpu.memory_space<smem>>
    %207 = vector.broadcast %206 : f32 to vector<16x16xf32>
    %208 = arith.mulf %207, %205 : vector<16x16xf32>
    %209 = arith.addf %204, %208 : vector<16x16xf32>
    %c2_124 = arith.constant 2 : index
    %c0_125 = arith.constant 0 : index
    %210 = vector.load %arg5[%c2_124, %c0_125] : memref<18x18xf32, #tpu.memory_space<vmem>>, vector<16x16xf32>
    %c15_126 = arith.constant 15 : index
    %211 = memref.load %arg2[%c15_126] : memref<36xf32, #tpu.memory_space<smem>>
    %212 = vector.broadcast %211 : f32 to vector<16x16xf32>
    %213 = arith.mulf %212, %210 : vector<16x16xf32>
    %214 = arith.addf %209, %213 : vector<16x16xf32>
    %c2_127 = arith.constant 2 : index
    %c1_128 = arith.constant 1 : index
    %215 = vector.load %arg5[%c2_127, %c1_128] : memref<18x18xf32, #tpu.memory_space<vmem>>, vector<16x16xf32>
    %c16 = arith.constant 16 : index
    %216 = memref.load %arg2[%c16] : memref<36xf32, #tpu.memory_space<smem>>
    %217 = vector.broadcast %216 : f32 to vector<16x16xf32>
    %218 = arith.mulf %217, %215 : vector<16x16xf32>
    %219 = arith.addf %214, %218 : vector<16x16xf32>
    %c2_129 = arith.constant 2 : index
    %c2_130 = arith.constant 2 : index
    %220 = vector.load %arg5[%c2_129, %c2_130] : memref<18x18xf32, #tpu.memory_space<vmem>>, vector<16x16xf32>
    %c17_131 = arith.constant 17 : index
    %221 = memref.load %arg2[%c17_131] : memref<36xf32, #tpu.memory_space<smem>>
    %222 = vector.broadcast %221 : f32 to vector<16x16xf32>
    %223 = arith.mulf %222, %220 : vector<16x16xf32>
    %224 = arith.addf %219, %223 : vector<16x16xf32>
    %c1_132 = arith.constant 1 : index
    %225 = memref.load %arg3[%c1_132] : memref<4xf32, #tpu.memory_space<smem>>
    %226 = vector.broadcast %225 : f32 to vector<16x16xf32>
    %227 = arith.addf %224, %226 : vector<16x16xf32>
    %c2_133 = arith.constant 2 : index
    %c0_134 = arith.constant 0 : index
    %c0_135 = arith.constant 0 : index
    %c0_136 = arith.constant 0 : index
    %c0_137 = arith.constant 0 : index
    %228 = vector.load %arg1[%c2_133, %c0_134, %c0_135, %c0_136, %c0_137] : memref<4x1x3x16x16xf32, #tpu.memory_space<vmem>>, vector<1x1x1x16x16xf32>
    %229 = vector.shape_cast %228 : vector<1x1x1x16x16xf32> to vector<16x16xf32>
    %c2_138 = arith.constant 2 : index
    %c0_139 = arith.constant 0 : index
    %c1_140 = arith.constant 1 : index
    %c0_141 = arith.constant 0 : index
    %c0_142 = arith.constant 0 : index
    %230 = vector.load %arg1[%c2_138, %c0_139, %c1_140, %c0_141, %c0_142] : memref<4x1x3x16x16xf32, #tpu.memory_space<vmem>>, vector<1x1x1x16x16xf32>
    %231 = vector.shape_cast %230 : vector<1x1x1x16x16xf32> to vector<16x16xf32>
    %c2_143 = arith.constant 2 : index
    %c0_144 = arith.constant 0 : index
    %c2_145 = arith.constant 2 : index
    %c0_146 = arith.constant 0 : index
    %c0_147 = arith.constant 0 : index
    %232 = vector.load %arg1[%c2_143, %c0_144, %c2_145, %c0_146, %c0_147] : memref<4x1x3x16x16xf32, #tpu.memory_space<vmem>>, vector<1x1x1x16x16xf32>
    %233 = vector.shape_cast %232 : vector<1x1x1x16x16xf32> to vector<16x16xf32>
    %cst_148 = arith.constant 2.990000e-01 : f32
    %234 = vector.broadcast %cst_148 : f32 to vector<16x16xf32>
    %235 = arith.mulf %234, %229 : vector<16x16xf32>
    %cst_149 = arith.constant 5.870000e-01 : f32
    %236 = vector.broadcast %cst_149 : f32 to vector<16x16xf32>
    %237 = arith.mulf %236, %231 : vector<16x16xf32>
    %238 = arith.addf %235, %237 : vector<16x16xf32>
    %cst_150 = arith.constant 1.140000e-01 : f32
    %239 = vector.broadcast %cst_150 : f32 to vector<16x16xf32>
    %240 = arith.mulf %239, %233 : vector<16x16xf32>
    %241 = arith.addf %238, %240 : vector<16x16xf32>
    %c1_151 = arith.constant 1 : index
    %c1_152 = arith.constant 1 : index
    %242 = vector.load %arg5[%c1_151, %c1_152] : memref<18x18xf32, #tpu.memory_space<vmem>>, vector<16x16xf32>
    tpu.vector_store %arg5[%c1_151, %c1_152], %241 {strides = array<i32>} : memref<18x18xf32, #tpu.memory_space<vmem>>, vector<16x16xf32>,
    %c1_153 = arith.constant 1 : index
    %c2_154 = arith.constant 2 : index
    %243 = vector.load %arg5[%c1_153, %c2_154] : memref<18x18xf32, #tpu.memory_space<vmem>>, vector<16x16xf32>
    %c2_155 = arith.constant 2 : index
    %c1_156 = arith.constant 1 : index
    %244 = vector.load %arg5[%c2_155, %c1_156] : memref<18x18xf32, #tpu.memory_space<vmem>>, vector<16x16xf32>
    %c15_i32_157 = arith.constant 15 : i32
    %245 = vector.broadcast %c15_i32_157 : i32 to vector<16x16xi32>
    %246 = arith.cmpi slt, %0, %245 : vector<16x16xi32>
    %247 = arith.subf %243, %241 : vector<16x16xf32>
    %cst_158 = arith.constant 0.000000e+00 : f32
    %248 = vector.broadcast %cst_158 : f32 to vector<16x16xf32>
    %249 = arith.select %246, %247, %248 : vector<16x16xi1>, vector<16x16xf32>
    %c15_i32_159 = arith.constant 15 : i32
    %250 = vector.broadcast %c15_i32_159 : i32 to vector<16x16xi32>
    %251 = arith.cmpi slt, %1, %250 : vector<16x16xi32>
    %252 = arith.subf %244, %241 : vector<16x16xf32>
    %cst_160 = arith.constant 0.000000e+00 : f32
    %253 = vector.broadcast %cst_160 : f32 to vector<16x16xf32>
    %254 = arith.select %251, %252, %253 : vector<16x16xi1>, vector<16x16xf32>
    %255 = arith.mulf %249, %249 : vector<16x16xf32>
    %256 = arith.mulf %254, %254 : vector<16x16xf32>
    %257 = arith.addf %255, %256 : vector<16x16xf32>
    %258 = math.sqrt %257 : vector<16x16xf32>
    %259 = arith.addf %229, %231 : vector<16x16xf32>
    %260 = arith.addf %259, %233 : vector<16x16xf32>
    %cst_161 = arith.constant 0.333333343 : f32
    %261 = vector.broadcast %cst_161 : f32 to vector<16x16xf32>
    %262 = arith.mulf %260, %261 : vector<16x16xf32>
    %263 = arith.subf %229, %262 : vector<16x16xf32>
    %264 = arith.mulf %263, %263 : vector<16x16xf32>
    %265 = arith.subf %231, %262 : vector<16x16xf32>
    %266 = arith.mulf %265, %265 : vector<16x16xf32>
    %267 = arith.addf %264, %266 : vector<16x16xf32>
    %268 = arith.subf %233, %262 : vector<16x16xf32>
    %269 = arith.mulf %268, %268 : vector<16x16xf32>
    %270 = arith.addf %267, %269 : vector<16x16xf32>
    %cst_162 = arith.constant 0.333333343 : f32
    %271 = vector.broadcast %cst_162 : f32 to vector<16x16xf32>
    %272 = arith.mulf %270, %271 : vector<16x16xf32>
    %273 = math.sqrt %272 : vector<16x16xf32>
    %cst_163 = arith.constant 5.000000e-01 : f32
    %274 = vector.broadcast %cst_163 : f32 to vector<16x16xf32>
    %275 = arith.subf %241, %274 : vector<16x16xf32>
    %cst_164 = arith.constant 0.000000e+00 : f32
    %276 = vector.broadcast %cst_164 : f32 to vector<16x16xf32>
    %277 = arith.subf %276, %275 : vector<16x16xf32>
    %278 = arith.mulf %277, %275 : vector<16x16xf32>
    %cst_165 = arith.constant 1.250000e+01 : f32
    %279 = vector.broadcast %cst_165 : f32 to vector<16x16xf32>
    %280 = arith.mulf %278, %279 : vector<16x16xf32>
    %281 = math.exp %280 : vector<16x16xf32>
    %282 = arith.mulf %258, %273 : vector<16x16xf32>
    %283 = arith.mulf %282, %281 : vector<16x16xf32>
    %c1_166 = arith.constant 1 : index
    %c1_167 = arith.constant 1 : index
    %284 = vector.load %arg5[%c1_166, %c1_167] : memref<18x18xf32, #tpu.memory_space<vmem>>, vector<16x16xf32>
    tpu.vector_store %arg5[%c1_166, %c1_167], %283 {strides = array<i32>} : memref<18x18xf32, #tpu.memory_space<vmem>>, vector<16x16xf32>,
    %285 = vector.extract_strided_slice %283 {offsets = [1, 0], sizes = [1, 16], strides = [1, 1]} : vector<16x16xf32> to vector<1x16xf32>
    %c0_168 = arith.constant 0 : index
    %c1_169 = arith.constant 1 : index
    %286 = vector.load %arg5[%c0_168, %c1_169] : memref<18x18xf32, #tpu.memory_space<vmem>>, vector<1x16xf32>
    tpu.vector_store %arg5[%c0_168, %c1_169], %285 {strides = array<i32>} : memref<18x18xf32, #tpu.memory_space<vmem>>, vector<1x16xf32>,
    %287 = vector.extract_strided_slice %283 {offsets = [14, 0], sizes = [1, 16], strides = [1, 1]} : vector<16x16xf32> to vector<1x16xf32>
    %c17_170 = arith.constant 17 : index
    %c1_171 = arith.constant 1 : index
    %288 = vector.load %arg5[%c17_170, %c1_171] : memref<18x18xf32, #tpu.memory_space<vmem>>, vector<1x16xf32>
    tpu.vector_store %arg5[%c17_170, %c1_171], %287 {strides = array<i32>} : memref<18x18xf32, #tpu.memory_space<vmem>>, vector<1x16xf32>,
    %c0_172 = arith.constant 0 : index
    %c2_173 = arith.constant 2 : index
    %289 = vector.load %arg5[%c0_172, %c2_173] : memref<18x18xf32, #tpu.memory_space<vmem>>, vector<18x1xf32>
    %c0_174 = arith.constant 0 : index
    %c0_175 = arith.constant 0 : index
    %290 = vector.load %arg5[%c0_174, %c0_175] : memref<18x18xf32, #tpu.memory_space<vmem>>, vector<18x1xf32>
    tpu.vector_store %arg5[%c0_174, %c0_175], %289 {strides = array<i32>} : memref<18x18xf32, #tpu.memory_space<vmem>>, vector<18x1xf32>,
    %c0_176 = arith.constant 0 : index
    %c15_177 = arith.constant 15 : index
    %291 = vector.load %arg5[%c0_176, %c15_177] : memref<18x18xf32, #tpu.memory_space<vmem>>, vector<18x1xf32>
    %c0_178 = arith.constant 0 : index
    %c17_179 = arith.constant 17 : index
    %292 = vector.load %arg5[%c0_178, %c17_179] : memref<18x18xf32, #tpu.memory_space<vmem>>, vector<18x1xf32>
    tpu.vector_store %arg5[%c0_178, %c17_179], %291 {strides = array<i32>} : memref<18x18xf32, #tpu.memory_space<vmem>>, vector<18x1xf32>,
    %c0_180 = arith.constant 0 : index
    %c0_181 = arith.constant 0 : index
    %293 = vector.load %arg5[%c0_180, %c0_181] : memref<18x18xf32, #tpu.memory_space<vmem>>, vector<16x16xf32>
    %c18 = arith.constant 18 : index
    %294 = memref.load %arg2[%c18] : memref<36xf32, #tpu.memory_space<smem>>
    %295 = vector.broadcast %294 : f32 to vector<16x16xf32>
    %296 = arith.mulf %295, %293 : vector<16x16xf32>
    %c0_182 = arith.constant 0 : index
    %c1_183 = arith.constant 1 : index
    %297 = vector.load %arg5[%c0_182, %c1_183] : memref<18x18xf32, #tpu.memory_space<vmem>>, vector<16x16xf32>
    %c19 = arith.constant 19 : index
    %298 = memref.load %arg2[%c19] : memref<36xf32, #tpu.memory_space<smem>>
    %299 = vector.broadcast %298 : f32 to vector<16x16xf32>
    %300 = arith.mulf %299, %297 : vector<16x16xf32>
    %301 = arith.addf %296, %300 : vector<16x16xf32>
    %c0_184 = arith.constant 0 : index
    %c2_185 = arith.constant 2 : index
    %302 = vector.load %arg5[%c0_184, %c2_185] : memref<18x18xf32, #tpu.memory_space<vmem>>, vector<16x16xf32>
    %c20 = arith.constant 20 : index
    %303 = memref.load %arg2[%c20] : memref<36xf32, #tpu.memory_space<smem>>
    %304 = vector.broadcast %303 : f32 to vector<16x16xf32>
    %305 = arith.mulf %304, %302 : vector<16x16xf32>
    %306 = arith.addf %301, %305 : vector<16x16xf32>
    %c1_186 = arith.constant 1 : index
    %c0_187 = arith.constant 0 : index
    %307 = vector.load %arg5[%c1_186, %c0_187] : memref<18x18xf32, #tpu.memory_space<vmem>>, vector<16x16xf32>
    %c21 = arith.constant 21 : index
    %308 = memref.load %arg2[%c21] : memref<36xf32, #tpu.memory_space<smem>>
    %309 = vector.broadcast %308 : f32 to vector<16x16xf32>
    %310 = arith.mulf %309, %307 : vector<16x16xf32>
    %311 = arith.addf %306, %310 : vector<16x16xf32>
    %c1_188 = arith.constant 1 : index
    %c1_189 = arith.constant 1 : index
    %312 = vector.load %arg5[%c1_188, %c1_189] : memref<18x18xf32, #tpu.memory_space<vmem>>, vector<16x16xf32>
    %c22 = arith.constant 22 : index
    %313 = memref.load %arg2[%c22] : memref<36xf32, #tpu.memory_space<smem>>
    %314 = vector.broadcast %313 : f32 to vector<16x16xf32>
    %315 = arith.mulf %314, %312 : vector<16x16xf32>
    %316 = arith.addf %311, %315 : vector<16x16xf32>
    %c1_190 = arith.constant 1 : index
    %c2_191 = arith.constant 2 : index
    %317 = vector.load %arg5[%c1_190, %c2_191] : memref<18x18xf32, #tpu.memory_space<vmem>>, vector<16x16xf32>
    %c23 = arith.constant 23 : index
    %318 = memref.load %arg2[%c23] : memref<36xf32, #tpu.memory_space<smem>>
    %319 = vector.broadcast %318 : f32 to vector<16x16xf32>
    %320 = arith.mulf %319, %317 : vector<16x16xf32>
    %321 = arith.addf %316, %320 : vector<16x16xf32>
    %c2_192 = arith.constant 2 : index
    %c0_193 = arith.constant 0 : index
    %322 = vector.load %arg5[%c2_192, %c0_193] : memref<18x18xf32, #tpu.memory_space<vmem>>, vector<16x16xf32>
    %c24 = arith.constant 24 : index
    %323 = memref.load %arg2[%c24] : memref<36xf32, #tpu.memory_space<smem>>
    %324 = vector.broadcast %323 : f32 to vector<16x16xf32>
    %325 = arith.mulf %324, %322 : vector<16x16xf32>
    %326 = arith.addf %321, %325 : vector<16x16xf32>
    %c2_194 = arith.constant 2 : index
    %c1_195 = arith.constant 1 : index
    %327 = vector.load %arg5[%c2_194, %c1_195] : memref<18x18xf32, #tpu.memory_space<vmem>>, vector<16x16xf32>
    %c25 = arith.constant 25 : index
    %328 = memref.load %arg2[%c25] : memref<36xf32, #tpu.memory_space<smem>>
    %329 = vector.broadcast %328 : f32 to vector<16x16xf32>
    %330 = arith.mulf %329, %327 : vector<16x16xf32>
    %331 = arith.addf %326, %330 : vector<16x16xf32>
    %c2_196 = arith.constant 2 : index
    %c2_197 = arith.constant 2 : index
    %332 = vector.load %arg5[%c2_196, %c2_197] : memref<18x18xf32, #tpu.memory_space<vmem>>, vector<16x16xf32>
    %c26 = arith.constant 26 : index
    %333 = memref.load %arg2[%c26] : memref<36xf32, #tpu.memory_space<smem>>
    %334 = vector.broadcast %333 : f32 to vector<16x16xf32>
    %335 = arith.mulf %334, %332 : vector<16x16xf32>
    %336 = arith.addf %331, %335 : vector<16x16xf32>
    %c2_198 = arith.constant 2 : index
    %337 = memref.load %arg3[%c2_198] : memref<4xf32, #tpu.memory_space<smem>>
    %338 = vector.broadcast %337 : f32 to vector<16x16xf32>
    %339 = arith.addf %336, %338 : vector<16x16xf32>
    %c3_199 = arith.constant 3 : index
    %c0_200 = arith.constant 0 : index
    %c0_201 = arith.constant 0 : index
    %c0_202 = arith.constant 0 : index
    %c0_203 = arith.constant 0 : index
    %340 = vector.load %arg1[%c3_199, %c0_200, %c0_201, %c0_202, %c0_203] : memref<4x1x3x16x16xf32, #tpu.memory_space<vmem>>, vector<1x1x1x16x16xf32>
    %341 = vector.shape_cast %340 : vector<1x1x1x16x16xf32> to vector<16x16xf32>
    %c3_204 = arith.constant 3 : index
    %c0_205 = arith.constant 0 : index
    %c1_206 = arith.constant 1 : index
    %c0_207 = arith.constant 0 : index
    %c0_208 = arith.constant 0 : index
    %342 = vector.load %arg1[%c3_204, %c0_205, %c1_206, %c0_207, %c0_208] : memref<4x1x3x16x16xf32, #tpu.memory_space<vmem>>, vector<1x1x1x16x16xf32>
    %343 = vector.shape_cast %342 : vector<1x1x1x16x16xf32> to vector<16x16xf32>
    %c3_209 = arith.constant 3 : index
    %c0_210 = arith.constant 0 : index
    %c2_211 = arith.constant 2 : index
    %c0_212 = arith.constant 0 : index
    %c0_213 = arith.constant 0 : index
    %344 = vector.load %arg1[%c3_209, %c0_210, %c2_211, %c0_212, %c0_213] : memref<4x1x3x16x16xf32, #tpu.memory_space<vmem>>, vector<1x1x1x16x16xf32>
    %345 = vector.shape_cast %344 : vector<1x1x1x16x16xf32> to vector<16x16xf32>
    %cst_214 = arith.constant 2.990000e-01 : f32
    %346 = vector.broadcast %cst_214 : f32 to vector<16x16xf32>
    %347 = arith.mulf %346, %341 : vector<16x16xf32>
    %cst_215 = arith.constant 5.870000e-01 : f32
    %348 = vector.broadcast %cst_215 : f32 to vector<16x16xf32>
    %349 = arith.mulf %348, %343 : vector<16x16xf32>
    %350 = arith.addf %347, %349 : vector<16x16xf32>
    %cst_216 = arith.constant 1.140000e-01 : f32
    %351 = vector.broadcast %cst_216 : f32 to vector<16x16xf32>
    %352 = arith.mulf %351, %345 : vector<16x16xf32>
    %353 = arith.addf %350, %352 : vector<16x16xf32>
    %c1_217 = arith.constant 1 : index
    %c1_218 = arith.constant 1 : index
    %354 = vector.load %arg5[%c1_217, %c1_218] : memref<18x18xf32, #tpu.memory_space<vmem>>, vector<16x16xf32>
    tpu.vector_store %arg5[%c1_217, %c1_218], %353 {strides = array<i32>} : memref<18x18xf32, #tpu.memory_space<vmem>>, vector<16x16xf32>,
    %c1_219 = arith.constant 1 : index
    %c2_220 = arith.constant 2 : index
    %355 = vector.load %arg5[%c1_219, %c2_220] : memref<18x18xf32, #tpu.memory_space<vmem>>, vector<16x16xf32>
    %c2_221 = arith.constant 2 : index
    %c1_222 = arith.constant 1 : index
    %356 = vector.load %arg5[%c2_221, %c1_222] : memref<18x18xf32, #tpu.memory_space<vmem>>, vector<16x16xf32>
    %c15_i32_223 = arith.constant 15 : i32
    %357 = vector.broadcast %c15_i32_223 : i32 to vector<16x16xi32>
    %358 = arith.cmpi slt, %0, %357 : vector<16x16xi32>
    %359 = arith.subf %355, %353 : vector<16x16xf32>
    %cst_224 = arith.constant 0.000000e+00 : f32
    %360 = vector.broadcast %cst_224 : f32 to vector<16x16xf32>
    %361 = arith.select %358, %359, %360 : vector<16x16xi1>, vector<16x16xf32>
    %c15_i32_225 = arith.constant 15 : i32
    %362 = vector.broadcast %c15_i32_225 : i32 to vector<16x16xi32>
    %363 = arith.cmpi slt, %1, %362 : vector<16x16xi32>
    %364 = arith.subf %356, %353 : vector<16x16xf32>
    %cst_226 = arith.constant 0.000000e+00 : f32
    %365 = vector.broadcast %cst_226 : f32 to vector<16x16xf32>
    %366 = arith.select %363, %364, %365 : vector<16x16xi1>, vector<16x16xf32>
    %367 = arith.mulf %361, %361 : vector<16x16xf32>
    %368 = arith.mulf %366, %366 : vector<16x16xf32>
    %369 = arith.addf %367, %368 : vector<16x16xf32>
    %370 = math.sqrt %369 : vector<16x16xf32>
    %371 = arith.addf %341, %343 : vector<16x16xf32>
    %372 = arith.addf %371, %345 : vector<16x16xf32>
    %cst_227 = arith.constant 0.333333343 : f32
    %373 = vector.broadcast %cst_227 : f32 to vector<16x16xf32>
    %374 = arith.mulf %372, %373 : vector<16x16xf32>
    %375 = arith.subf %341, %374 : vector<16x16xf32>
    %376 = arith.mulf %375, %375 : vector<16x16xf32>
    %377 = arith.subf %343, %374 : vector<16x16xf32>
    %378 = arith.mulf %377, %377 : vector<16x16xf32>
    %379 = arith.addf %376, %378 : vector<16x16xf32>
    %380 = arith.subf %345, %374 : vector<16x16xf32>
    %381 = arith.mulf %380, %380 : vector<16x16xf32>
    %382 = arith.addf %379, %381 : vector<16x16xf32>
    %cst_228 = arith.constant 0.333333343 : f32
    %383 = vector.broadcast %cst_228 : f32 to vector<16x16xf32>
    %384 = arith.mulf %382, %383 : vector<16x16xf32>
    %385 = math.sqrt %384 : vector<16x16xf32>
    %cst_229 = arith.constant 5.000000e-01 : f32
    %386 = vector.broadcast %cst_229 : f32 to vector<16x16xf32>
    %387 = arith.subf %353, %386 : vector<16x16xf32>
    %cst_230 = arith.constant 0.000000e+00 : f32
    %388 = vector.broadcast %cst_230 : f32 to vector<16x16xf32>
    %389 = arith.subf %388, %387 : vector<16x16xf32>
    %390 = arith.mulf %389, %387 : vector<16x16xf32>
    %cst_231 = arith.constant 1.250000e+01 : f32
    %391 = vector.broadcast %cst_231 : f32 to vector<16x16xf32>
    %392 = arith.mulf %390, %391 : vector<16x16xf32>
    %393 = math.exp %392 : vector<16x16xf32>
    %394 = arith.mulf %370, %385 : vector<16x16xf32>
    %395 = arith.mulf %394, %393 : vector<16x16xf32>
    %c1_232 = arith.constant 1 : index
    %c1_233 = arith.constant 1 : index
    %396 = vector.load %arg5[%c1_232, %c1_233] : memref<18x18xf32, #tpu.memory_space<vmem>>, vector<16x16xf32>
    tpu.vector_store %arg5[%c1_232, %c1_233], %395 {strides = array<i32>} : memref<18x18xf32, #tpu.memory_space<vmem>>, vector<16x16xf32>,
    %397 = vector.extract_strided_slice %395 {offsets = [1, 0], sizes = [1, 16], strides = [1, 1]} : vector<16x16xf32> to vector<1x16xf32>
    %c0_234 = arith.constant 0 : index
    %c1_235 = arith.constant 1 : index
    %398 = vector.load %arg5[%c0_234, %c1_235] : memref<18x18xf32, #tpu.memory_space<vmem>>, vector<1x16xf32>
    tpu.vector_store %arg5[%c0_234, %c1_235], %397 {strides = array<i32>} : memref<18x18xf32, #tpu.memory_space<vmem>>, vector<1x16xf32>,
    %399 = vector.extract_strided_slice %395 {offsets = [14, 0], sizes = [1, 16], strides = [1, 1]} : vector<16x16xf32> to vector<1x16xf32>
    %c17_236 = arith.constant 17 : index
    %c1_237 = arith.constant 1 : index
    %400 = vector.load %arg5[%c17_236, %c1_237] : memref<18x18xf32, #tpu.memory_space<vmem>>, vector<1x16xf32>
    tpu.vector_store %arg5[%c17_236, %c1_237], %399 {strides = array<i32>} : memref<18x18xf32, #tpu.memory_space<vmem>>, vector<1x16xf32>,
    %c0_238 = arith.constant 0 : index
    %c2_239 = arith.constant 2 : index
    %401 = vector.load %arg5[%c0_238, %c2_239] : memref<18x18xf32, #tpu.memory_space<vmem>>, vector<18x1xf32>
    %c0_240 = arith.constant 0 : index
    %c0_241 = arith.constant 0 : index
    %402 = vector.load %arg5[%c0_240, %c0_241] : memref<18x18xf32, #tpu.memory_space<vmem>>, vector<18x1xf32>
    tpu.vector_store %arg5[%c0_240, %c0_241], %401 {strides = array<i32>} : memref<18x18xf32, #tpu.memory_space<vmem>>, vector<18x1xf32>,
    %c0_242 = arith.constant 0 : index
    %c15_243 = arith.constant 15 : index
    %403 = vector.load %arg5[%c0_242, %c15_243] : memref<18x18xf32, #tpu.memory_space<vmem>>, vector<18x1xf32>
    %c0_244 = arith.constant 0 : index
    %c17_245 = arith.constant 17 : index
    %404 = vector.load %arg5[%c0_244, %c17_245] : memref<18x18xf32, #tpu.memory_space<vmem>>, vector<18x1xf32>
    tpu.vector_store %arg5[%c0_244, %c17_245], %403 {strides = array<i32>} : memref<18x18xf32, #tpu.memory_space<vmem>>, vector<18x1xf32>,
    %c0_246 = arith.constant 0 : index
    %c0_247 = arith.constant 0 : index
    %405 = vector.load %arg5[%c0_246, %c0_247] : memref<18x18xf32, #tpu.memory_space<vmem>>, vector<16x16xf32>
    %c27 = arith.constant 27 : index
    %406 = memref.load %arg2[%c27] : memref<36xf32, #tpu.memory_space<smem>>
    %407 = vector.broadcast %406 : f32 to vector<16x16xf32>
    %408 = arith.mulf %407, %405 : vector<16x16xf32>
    %c0_248 = arith.constant 0 : index
    %c1_249 = arith.constant 1 : index
    %409 = vector.load %arg5[%c0_248, %c1_249] : memref<18x18xf32, #tpu.memory_space<vmem>>, vector<16x16xf32>
    %c28 = arith.constant 28 : index
    %410 = memref.load %arg2[%c28] : memref<36xf32, #tpu.memory_space<smem>>
    %411 = vector.broadcast %410 : f32 to vector<16x16xf32>
    %412 = arith.mulf %411, %409 : vector<16x16xf32>
    %413 = arith.addf %408, %412 : vector<16x16xf32>
    %c0_250 = arith.constant 0 : index
    %c2_251 = arith.constant 2 : index
    %414 = vector.load %arg5[%c0_250, %c2_251] : memref<18x18xf32, #tpu.memory_space<vmem>>, vector<16x16xf32>
    %c29 = arith.constant 29 : index
    %415 = memref.load %arg2[%c29] : memref<36xf32, #tpu.memory_space<smem>>
    %416 = vector.broadcast %415 : f32 to vector<16x16xf32>
    %417 = arith.mulf %416, %414 : vector<16x16xf32>
    %418 = arith.addf %413, %417 : vector<16x16xf32>
    %c1_252 = arith.constant 1 : index
    %c0_253 = arith.constant 0 : index
    %419 = vector.load %arg5[%c1_252, %c0_253] : memref<18x18xf32, #tpu.memory_space<vmem>>, vector<16x16xf32>
    %c30 = arith.constant 30 : index
    %420 = memref.load %arg2[%c30] : memref<36xf32, #tpu.memory_space<smem>>
    %421 = vector.broadcast %420 : f32 to vector<16x16xf32>
    %422 = arith.mulf %421, %419 : vector<16x16xf32>
    %423 = arith.addf %418, %422 : vector<16x16xf32>
    %c1_254 = arith.constant 1 : index
    %c1_255 = arith.constant 1 : index
    %424 = vector.load %arg5[%c1_254, %c1_255] : memref<18x18xf32, #tpu.memory_space<vmem>>, vector<16x16xf32>
    %c31 = arith.constant 31 : index
    %425 = memref.load %arg2[%c31] : memref<36xf32, #tpu.memory_space<smem>>
    %426 = vector.broadcast %425 : f32 to vector<16x16xf32>
    %427 = arith.mulf %426, %424 : vector<16x16xf32>
    %428 = arith.addf %423, %427 : vector<16x16xf32>
    %c1_256 = arith.constant 1 : index
    %c2_257 = arith.constant 2 : index
    %429 = vector.load %arg5[%c1_256, %c2_257] : memref<18x18xf32, #tpu.memory_space<vmem>>, vector<16x16xf32>
    %c32 = arith.constant 32 : index
    %430 = memref.load %arg2[%c32] : memref<36xf32, #tpu.memory_space<smem>>
    %431 = vector.broadcast %430 : f32 to vector<16x16xf32>
    %432 = arith.mulf %431, %429 : vector<16x16xf32>
    %433 = arith.addf %428, %432 : vector<16x16xf32>
    %c2_258 = arith.constant 2 : index
    %c0_259 = arith.constant 0 : index
    %434 = vector.load %arg5[%c2_258, %c0_259] : memref<18x18xf32, #tpu.memory_space<vmem>>, vector<16x16xf32>
    %c33 = arith.constant 33 : index
    %435 = memref.load %arg2[%c33] : memref<36xf32, #tpu.memory_space<smem>>
    %436 = vector.broadcast %435 : f32 to vector<16x16xf32>
    %437 = arith.mulf %436, %434 : vector<16x16xf32>
    %438 = arith.addf %433, %437 : vector<16x16xf32>
    %c2_260 = arith.constant 2 : index
    %c1_261 = arith.constant 1 : index
    %439 = vector.load %arg5[%c2_260, %c1_261] : memref<18x18xf32, #tpu.memory_space<vmem>>, vector<16x16xf32>
    %c34 = arith.constant 34 : index
    %440 = memref.load %arg2[%c34] : memref<36xf32, #tpu.memory_space<smem>>
    %441 = vector.broadcast %440 : f32 to vector<16x16xf32>
    %442 = arith.mulf %441, %439 : vector<16x16xf32>
    %443 = arith.addf %438, %442 : vector<16x16xf32>
    %c2_262 = arith.constant 2 : index
    %c2_263 = arith.constant 2 : index
    %444 = vector.load %arg5[%c2_262, %c2_263] : memref<18x18xf32, #tpu.memory_space<vmem>>, vector<16x16xf32>
    %c35 = arith.constant 35 : index
    %445 = memref.load %arg2[%c35] : memref<36xf32, #tpu.memory_space<smem>>
    %446 = vector.broadcast %445 : f32 to vector<16x16xf32>
    %447 = arith.mulf %446, %444 : vector<16x16xf32>
    %448 = arith.addf %443, %447 : vector<16x16xf32>
    %c3_264 = arith.constant 3 : index
    %449 = memref.load %arg3[%c3_264] : memref<4xf32, #tpu.memory_space<smem>>
    %450 = vector.broadcast %449 : f32 to vector<16x16xf32>
    %451 = arith.addf %448, %450 : vector<16x16xf32>
    %452 = arith.maximumf %115, %227 : vector<16x16xf32>
    %453 = arith.maximumf %452, %339 : vector<16x16xf32>
    %454 = arith.maximumf %453, %451 : vector<16x16xf32>
    %455 = arith.subf %115, %454 : vector<16x16xf32>
    %456 = math.exp %455 : vector<16x16xf32>
    %457 = arith.subf %227, %454 : vector<16x16xf32>
    %458 = math.exp %457 : vector<16x16xf32>
    %459 = arith.subf %339, %454 : vector<16x16xf32>
    %460 = math.exp %459 : vector<16x16xf32>
    %461 = arith.subf %451, %454 : vector<16x16xf32>
    %462 = math.exp %461 : vector<16x16xf32>
    %463 = arith.addf %456, %458 : vector<16x16xf32>
    %464 = arith.addf %463, %460 : vector<16x16xf32>
    %465 = arith.addf %464, %462 : vector<16x16xf32>
    %cst_265 = arith.constant 1.000000e+00 : f32
    %466 = vector.broadcast %cst_265 : f32 to vector<16x16xf32>
    %467 = arith.divf %466, %465 : vector<16x16xf32>
    %468 = arith.mulf %456, %467 : vector<16x16xf32>
    %c0_266 = arith.constant 0 : index
    %c0_267 = arith.constant 0 : index
    %c0_268 = arith.constant 0 : index
    %c0_269 = arith.constant 0 : index
    %469 = vector.load %arg4[%c0_266, %c0_267, %c0_268, %c0_269] : memref<1x4x16x16xf32, #tpu.memory_space<vmem>>, vector<1x1x16x16xf32>
    %470 = vector.shape_cast %469 : vector<1x1x16x16xf32> to vector<16x16xf32>
    %471 = vector.shape_cast %468 : vector<16x16xf32> to vector<1x1x16x16xf32>
    tpu.vector_store %arg4[%c0_266, %c0_267, %c0_268, %c0_269], %471 {strides = array<i32>} : memref<1x4x16x16xf32, #tpu.memory_space<vmem>>, vector<1x1x16x16xf32>,
    %472 = arith.mulf %458, %467 : vector<16x16xf32>
    %c0_270 = arith.constant 0 : index
    %c1_271 = arith.constant 1 : index
    %c0_272 = arith.constant 0 : index
    %c0_273 = arith.constant 0 : index
    %473 = vector.load %arg4[%c0_270, %c1_271, %c0_272, %c0_273] : memref<1x4x16x16xf32, #tpu.memory_space<vmem>>, vector<1x1x16x16xf32>
    %474 = vector.shape_cast %473 : vector<1x1x16x16xf32> to vector<16x16xf32>
    %475 = vector.shape_cast %472 : vector<16x16xf32> to vector<1x1x16x16xf32>
    tpu.vector_store %arg4[%c0_270, %c1_271, %c0_272, %c0_273], %475 {strides = array<i32>} : memref<1x4x16x16xf32, #tpu.memory_space<vmem>>, vector<1x1x16x16xf32>,
    %476 = arith.mulf %460, %467 : vector<16x16xf32>
    %c0_274 = arith.constant 0 : index
    %c2_275 = arith.constant 2 : index
    %c0_276 = arith.constant 0 : index
    %c0_277 = arith.constant 0 : index
    %477 = vector.load %arg4[%c0_274, %c2_275, %c0_276, %c0_277] : memref<1x4x16x16xf32, #tpu.memory_space<vmem>>, vector<1x1x16x16xf32>
    %478 = vector.shape_cast %477 : vector<1x1x16x16xf32> to vector<16x16xf32>
    %479 = vector.shape_cast %476 : vector<16x16xf32> to vector<1x1x16x16xf32>
    tpu.vector_store %arg4[%c0_274, %c2_275, %c0_276, %c0_277], %479 {strides = array<i32>} : memref<1x4x16x16xf32, #tpu.memory_space<vmem>>, vector<1x1x16x16xf32>,
    %480 = arith.mulf %462, %467 : vector<16x16xf32>
    %c0_278 = arith.constant 0 : index
    %c3_279 = arith.constant 3 : index
    %c0_280 = arith.constant 0 : index
    %c0_281 = arith.constant 0 : index
    %481 = vector.load %arg4[%c0_278, %c3_279, %c0_280, %c0_281] : memref<1x4x16x16xf32, #tpu.memory_space<vmem>>, vector<1x1x16x16xf32>
    %482 = vector.shape_cast %481 : vector<1x1x16x16xf32> to vector<16x16xf32>
    %483 = vector.shape_cast %480 : vector<16x16xf32> to vector<1x1x16x16xf32>
    tpu.vector_store %arg4[%c0_278, %c3_279, %c0_280, %c0_281], %483 {strides = array<i32>} : memref<1x4x16x16xf32, #tpu.memory_space<vmem>>, vector<1x1x16x16xf32>,
    return
  }
  func.func @transform_0(%arg0: i32) -> (i32, i32, i32, i32, i32) {
    %c0_i32 = arith.constant 0 : i32
    %c0_i32_0 = arith.constant 0 : i32
    %c0_i32_1 = arith.constant 0 : i32
    %c0_i32_2 = arith.constant 0 : i32
    %c0_i32_3 = arith.constant 0 : i32
    return %c0_i32, %arg0, %c0_i32_0, %c0_i32_1, %c0_i32_2 : i32, i32, i32, i32, i32
  }
  func.func @transform_1(%arg0: i32) -> i32 {
    %c0_i32 = arith.constant 0 : i32
    %c0_i32_0 = arith.constant 0 : i32
    return %c0_i32 : i32
  }
  func.func @transform_2(%arg0: i32) -> i32 {
    %c0_i32 = arith.constant 0 : i32
    %c0_i32_0 = arith.constant 0 : i32
    return %c0_i32 : i32
  }
  func.func @transform_3(%arg0: i32) -> (i32, i32, i32, i32) {
    %c0_i32 = arith.constant 0 : i32
    %c0_i32_0 = arith.constant 0 : i32
    %c0_i32_1 = arith.constant 0 : i32
    %c0_i32_2 = arith.constant 0 : i32
    return %arg0, %c0_i32, %c0_i32_0, %c0_i32_1 : i32, i32, i32, i32
  }
}

</mosaic_0001>

<llo_original>
// kernel: tpu_custom_call.1
$region0: #{tpu_custom_call.1}
  #allocation0 [shape = 'u32[]', space=smem, size = 0x4, offset = 0x4, fixed_abs, tag = 'smem constant byte address 0x4 - core index']
  #allocation1 [shape = 'u32[144,128]{1,0:T(1,128)}', space=vmem, size = 0x12000, scoped, tag = 'internal scratch']
  #allocation2 [shape = 'f32[18,18]{1,0:T(8,128)}', space=vmem, size = 0x3000, scoped, tag = 'scratch operand']
  #allocation11 [shape = 's32[]', space=sflag, size = 0x4, offset = 0, fixed_abs, tag = 'sflag constant byte address 0x0 - dummy sync flag']
  %s0 = inlined_call_operand.hbm [shape: f32[4,2,3,16,16], index: 0, kind: input, shape index: {}]
  %s1 = inlined_call_operand.vmem [shape: f32[36], index: 1, kind: input, shape index: {}]
  %s2 = inlined_call_operand.vmem [shape: f32[4], index: 2, kind: input, shape index: {}]
  %s3 = inlined_call_operand.hbm [shape: f32[2,4,16,16], index: 3, kind: output, shape index: {}]
  %s4 = sld [smem:[#allocation0]]
  $region57: #{tpu_custom_call.1} parent=0
    _
  %s6 = ssub.s32 1, %s4
  %s7 = scalar_select 0, %s6, %s4
  $region1: #{tpu_custom_call.1} parent=0
    #allocation3 [shape = 'u8[196608]{0}', space=vmem, size = 0x30000, scoped, tag = 'input window, operand 0']
    #allocation4 [shape = 's32[2]{0}', space=sflag, size = 0x8, scoped, tag = 'scoped memory for tpu_custom_call.1']
    #allocation5 [shape = 's32[2]{0}', space=sflag, size = 0x8, scoped, tag = 'scoped memory for tpu_custom_call.1']
    #allocation6 [shape = 's32[2]{0}', space=sflag, size = 0x8, scoped, tag = 'scoped memory for tpu_custom_call.1']
    #allocation7 [shape = 'u8[512]{0}', space=smem, size = 0x200, scoped, tag = 'input window, operand 1, single buffered']
    #allocation8 [shape = 'u8[512]{0}', space=smem, size = 0x200, scoped, tag = 'input window, operand 2, single buffered']
    #allocation9 [shape = 's32[1]{0}', space=sflag, size = 0x4, scoped, tag = 'scoped memory for tpu_custom_call.1']
    #allocation10 [shape = 'u8[65536]{0}', space=vmem, size = 0x10000, scoped, tag = 'output window, operand 0']
    %8 = vsyncpa [#allocation4], 0
    %s9 = scalar_lea.sflag [#allocation4], 1
    %10 = vsyncpa %s9, 0
    %11 = vsyncpa [#allocation6], 0
    %12 = vsyncpa [#allocation9], 0
    %13 = vsyncpa [#allocation5], 0
    %s14 = scalar_lea.sflag [#allocation5], 1
    %15 = vsyncpa %s14, 0
    loop: start=0, step=1, limit=4
    $region2: #{tpu_custom_call.1} parent=1 // loop_pre_header
      _
    $region3: #{tpu_custom_call.1} parent=1 // loop_header
      %s17 = sphi 0, %s21
      %p18 = scmp.ge.s32.totalorder %s17, 4
      %s27 = sphi 0, %s29
      %s30 = sphi 0, %s27
      %s31 = sphi 0, %s30
      %s47 = sphi 0, %s31
      %s51 = sphi 0, %s51
      %s53 = sphi 0, %s51
      %s54 = sphi 0, %s53
      %s68 = sphi 0, %s54
      %s72 = sphi 0, %s72
      %s74 = sphi 0, %s72
      %s75 = sphi 0, %s74
      %s89 = sphi 0, %s75
      %s95 = sphi 0, %s97
      %s98 = sphi 0, %s95
      %s99 = sphi 0, %s98
      %s115 = sphi 0, %s99
    $region4: #{tpu_custom_call.1} parent=1 // loop_header_branch
      %20 = sbr.rel (%p18) target = $region8
    $region5: #{tpu_custom_call.1} parent=1 // loop_body
      %s22 = ssub.s32 %s17, 1
      %s23 = ssub.s32 %s17, 2
      %s24 = sadd.s32 %s17, 1
      %s25 = ssub.s32 %s17, %s24
      %p26 = scmp.eq.s32.totalorder %s25, 0
      %s28 = sadd.s32 %s27, 1
      %s29 = scalar_select %p26, %s27, %s28
      %p32 = pneg %p26
      %p33 = scmp.eq.s32.totalorder %s17, 1
      %p34 = por %p32, %p33
      %p35 = scmp.ne.s32.totalorder %s27, %s30
      %p36 = scmp.eq.s32.totalorder %s17, 0
      %p37 = por %p35, %p36
      %p38 = scmp.ne.s32.totalorder %s27, %s30
      %p39 = scmp.eq.s32.totalorder %s22, 1
      %p40 = por %p38, %p39
      %p41 = scmp.ne.s32.totalorder %s30, %s31
      %p42 = scmp.eq.s32.totalorder %s22, 0
      %p43 = por %p41, %p42
      %p44 = scmp.ne.s32.totalorder %s30, %s31
      %p45 = scmp.eq.s32.totalorder %s23, 1
      %p46 = por %p44, %p45
      %p48 = scmp.ne.s32.totalorder %s31, %s47
      %p49 = scmp.eq.s32.totalorder %s23, 0
      %p50 = por %p48, %p49
      %s52 = sadd.s32 %s51, 1
      %p55 = scmp.eq.s32.totalorder %s17, 1
      %p56 = scmp.ne.s32.totalorder %s51, %s53
      %p57 = scmp.eq.s32.totalorder %s17, 0
      %p58 = por %p56, %p57
      %p59 = scmp.ne.s32.totalorder %s51, %s53
      %p60 = scmp.eq.s32.totalorder %s22, 1
      %p61 = por %p59, %p60
      %p62 = scmp.ne.s32.totalorder %s53, %s54
      %p63 = scmp.eq.s32.totalorder %s22, 0
      %p64 = por %p62, %p63
      %p65 = scmp.ne.s32.totalorder %s53, %s54
      %p66 = scmp.eq.s32.totalorder %s23, 1
      %p67 = por %p65, %p66
      %p69 = scmp.ne.s32.totalorder %s54, %s68
      %p70 = scmp.eq.s32.totalorder %s23, 0
      %p71 = por %p69, %p70
      %s73 = sadd.s32 %s72, 1
      %p76 = scmp.eq.s32.totalorder %s17, 1
      %p77 = scmp.ne.s32.totalorder %s72, %s74
      %p78 = scmp.eq.s32.totalorder %s17, 0
      %p79 = por %p77, %p78
      %p80 = scmp.ne.s32.totalorder %s72, %s74
      %p81 = scmp.eq.s32.totalorder %s22, 1
      %p82 = por %p80, %p81
      %p83 = scmp.ne.s32.totalorder %s74, %s75
      %p84 = scmp.eq.s32.totalorder %s22, 0
      %p85 = por %p83, %p84
      %p86 = scmp.ne.s32.totalorder %s74, %s75
      %p87 = scmp.eq.s32.totalorder %s23, 1
      %p88 = por %p86, %p87
      %p90 = scmp.ne.s32.totalorder %s75, %s89
      %p91 = scmp.eq.s32.totalorder %s23, 0
      %p92 = por %p90, %p91
      %s93 = ssub.s32 %s17, %s24
      %p94 = scmp.eq.s32.totalorder %s93, 0
      %s96 = sadd.s32 %s95, 1
      %s97 = scalar_select %p94, %s95, %s96
      %p100 = pneg %p94
      %p101 = scmp.eq.s32.totalorder %s17, 1
      %p102 = por %p100, %p101
      %p103 = scmp.ne.s32.totalorder %s95, %s98
      %p104 = scmp.eq.s32.totalorder %s17, 0
      %p105 = por %p103, %p104
      %p106 = scmp.ne.s32.totalorder %s95, %s98
      %p107 = scmp.eq.s32.totalorder %s22, 1
      %p108 = por %p106, %p107
      %p109 = scmp.ne.s32.totalorder %s98, %s99
      %p110 = scmp.eq.s32.totalorder %s22, 0
      %p111 = por %p109, %p110
      %p112 = scmp.ne.s32.totalorder %s98, %s99
      %p113 = scmp.eq.s32.totalorder %s23, 1
      %p114 = por %p112, %p113
      %p116 = scmp.ne.s32.totalorder %s99, %s115
      %p117 = scmp.eq.s32.totalorder %s23, 0
      %p118 = por %p116, %p117
      %p119 = scmp.le.s32.totalorder 1, %s17
      %p120 = scmp.lt.s32.totalorder %s17, 3
      %p121 = pnand %p119, %p120
      %p122 = pneg %p121
      // Predicated region
      $region9: #{tpu_custom_call.1} parent=5 // pred_check
        _
      $region10: #{tpu_custom_call.1} parent=5 // pred_check_branch
        %124 = sbr.rel (%p121) target = $region12
      $region11: #{tpu_custom_call.1} parent=5 // pred_region
        %s125 = ssub.s32 %s17, 1
        // Predicated region
        $region13: #{tpu_custom_call.1} parent=11 // pred_check
          %p126 = pneg %p64
        $region14: #{tpu_custom_call.1} parent=11 // pred_check_branch
          %128 = sbr.rel (%p126) target = $region16
        $region15: #{tpu_custom_call.1} parent=11 // pred_region
          %s130 = ssub.s32 16, 16
          %131 = vsyncadd [#allocation6], %s130
          %s133 = sshll.u32 %s1, 4
          %s134 = int_to_ptr.vmem [resolvable:$true] %s133
          %136 = dma.vmem_to_smem %s134, 16, [#allocation7], [#allocation6]
        $region16: #{tpu_custom_call.1} parent=11 // pred_fallthru
          _
        // Predicated region
        $region17: #{tpu_custom_call.1} parent=11 // pred_check
          %p137 = pneg %p85
        $region18: #{tpu_custom_call.1} parent=11 // pred_check_branch
          %139 = sbr.rel (%p137) target = $region20
        $region19: #{tpu_custom_call.1} parent=11 // pred_region
          %s141 = ssub.s32 16, 16
          %142 = vsyncadd [#allocation9], %s141
          %s144 = sshll.u32 %s2, 4
          %s145 = int_to_ptr.vmem [resolvable:$true] %s144
          %147 = dma.vmem_to_smem %s145, 16, [#allocation8], [#allocation9]
        $region20: #{tpu_custom_call.1} parent=11 // pred_fallthru
          _
      $region12: #{tpu_custom_call.1} parent=5 // pred_fallthru
        _
      %p148 = scmp.lt.s32.totalorder %s17, 2
      // Predicated region
      $region21: #{tpu_custom_call.1} parent=5 // pred_check
        %p149 = pneg %p148
      $region22: #{tpu_custom_call.1} parent=5 // pred_check_branch
        %151 = sbr.rel (%p149) target = $region24
      $region23: #{tpu_custom_call.1} parent=5 // pred_region
        // Predicated region
        $region25: #{tpu_custom_call.1} parent=23 // pred_check
          %p152 = pneg %p37
        $region26: #{tpu_custom_call.1} parent=23 // pred_check_branch
          %154 = sbr.rel (%p152) target = $region28
        $region27: #{tpu_custom_call.1} parent=23 // pred_region
          #allocation12 [shape = 'u32[6]{0}', space=smem, size = 0x18, scoped, tag = 'DMA stride descriptor']
          %s155 = sand.u32 %s27, 1
          %s156 = scalar_lea.sflag [#allocation4], %s155
          %s157 = sand.u32 %s27, 1
          %s158 = smul.addr %s157, 192
          %s159 = scalar_lea.vmem [#allocation3], %s158
          %s161 = ssub.s32 3072, 3072
          %162 = vsyncadd %s156, %s161
          %s163 = smul.addr %s17, 6
          %s164 = smul.addr %s163, 128
          %s165 = scalar_lea.hbm %s0, %s164
          %s167 = sshll.u32 1, 14
          %s168 = sxor.u32 4294967295, %s167
          %s170 = sld [smem:[#allocation0]]
          %s171 = sadd.s32 2, %s170
          %s173 = sshll.u32 7, 26
          %s174 = sxor.u32 4294967295, %s173
          %s175 = sand.u32 0, %s174
          %s176 = sshll.u32 %s171, 26
          %s177 = sor.u32 %s175, %s176
          %s178 = sshll.u32 %s159, 4
          %s179 = int_to_ptr.vmem [resolvable:$true] %s178
          %185 = sst [smem:[#allocation12]] 1536
          %s186 = scalar_lea.smem [#allocation12], 1
          %187 = sst [smem:[%s186]] 768
          %s188 = scalar_lea.smem [#allocation12], 2
          %189 = sst [smem:[%s188]] 6
          %s190 = scalar_lea.smem [#allocation12], 3
          %191 = sst [smem:[%s190]] 128
          %s192 = scalar_lea.smem [#allocation12], 4
          %193 = sst [smem:[%s192]] 128
          %s194 = scalar_lea.smem [#allocation12], 5
          %195 = sst [smem:[%s194]] 8
          %197 = dma.general %s165, 3072, %s179, %s156, [#allocation11], [#allocation12], %s177, 0
        $region28: #{tpu_custom_call.1} parent=23 // pred_fallthru
          _
      $region24: #{tpu_custom_call.1} parent=5 // pred_fallthru
        _
      %p198 = scmp.le.s32.totalorder 1, %s17
      %p199 = scmp.lt.s32.totalorder %s17, 3
      %p200 = pnand %p198, %p199
      %p201 = pneg %p200
      // Predicated region
      $region29: #{tpu_custom_call.1} parent=5 // pred_check
        _
      $region30: #{tpu_custom_call.1} parent=5 // pred_check_branch
        %203 = sbr.rel (%p200) target = $region32
      $region31: #{tpu_custom_call.1} parent=5 // pred_region
        %s204 = ssub.s32 %s17, 1
        %s205 = sand.u32 %s30, 1
        %s206 = scalar_lea.sflag [#allocation4], %s205
        %s207 = sand.u32 %s30, 1
        %s208 = smul.addr %s207, 192
        %s209 = scalar_lea.vmem [#allocation3], %s208
        // Predicated region
        $region33: #{tpu_custom_call.1} parent=31 // pred_check
          %p210 = pneg %p43
        $region34: #{tpu_custom_call.1} parent=31 // pred_check_branch
          %212 = sbr.rel (%p210) target = $region36
        $region35: #{tpu_custom_call.1} parent=31 // pred_region
          %213 = dma.done %s206, 3072
        $region36: #{tpu_custom_call.1} parent=31 // pred_fallthru
          _
        // Predicated region
        $region37: #{tpu_custom_call.1} parent=31 // pred_check
          %p214 = pneg %p64
        $region38: #{tpu_custom_call.1} parent=31 // pred_check_branch
          %216 = sbr.rel (%p214) target = $region40
        $region39: #{tpu_custom_call.1} parent=31 // pred_region
          %217 = dma.done [#allocation6], 16
        $region40: #{tpu_custom_call.1} parent=31 // pred_fallthru
          _
        // Predicated region
        $region41: #{tpu_custom_call.1} parent=31 // pred_check
          %p218 = pneg %p85
        $region42: #{tpu_custom_call.1} parent=31 // pred_check_branch
          %220 = sbr.rel (%p218) target = $region44
        $region43: #{tpu_custom_call.1} parent=31 // pred_region
          %221 = dma.done [#allocation9], 16
        $region44: #{tpu_custom_call.1} parent=31 // pred_fallthru
          _
        %222 = sfence
        %s223 = sand.u32 %s30, 1
        %s224 = scalar_lea.sflag [#allocation4], %s223
        %s225 = sand.u32 %s30, 1
        %s226 = smul.addr %s225, 192
        %s227 = scalar_lea.vmem [#allocation3], %s226
        %p228 = pneg %p43
        %p229 = pneg %p40
        %p230 = pneg %p64
        %p231 = pneg %p61
        %p232 = pneg %p85
        %p233 = pneg %p82
        %p234 = pneg %p111
        %p235 = pneg %p108
        %s236 = sand.u32 %s98, 1
        %s237 = scalar_lea.sflag [#allocation5], %s236
        %s238 = sand.u32 %s98, 1
        %s239 = smul.addr %s238, 64
        %s240 = scalar_lea.vmem [#allocation10], %s239
        %v241 = vlaneseq
        %v242 = vand.u32 %v241, 127
        %v243 = vlaneseq
        %v244 = vshrl.u32 %v243, 7
        %v245 = vadd.s32 %v244, 8
        %vm246 = vcmask 146432
        %247 = vst.msk [vmem:[#allocation2] sm:$0xff] %vm246, 0.0
        %248 = vst.msk [vmem:[#allocation2 + $0x8] sm:$0xff] %vm246, 0.0
        %vm249 = vcmask 140288
        %250 = vst.msk [vmem:[#allocation2 + $0x10] sm:$0x3] %vm249, 0.0
        %v251 = vld [vmem:[%s209] sm:$0xff]
        %v252 = vld [vmem:[%s209 + $0x8] sm:$0xff]
        %s253 = scalar_lea.vmem %s209, 16 [#allocation3]
        %v254 = vld [vmem:[%s253] sm:$0xff]
        %v255 = vld [vmem:[%s253 + $0x8] sm:$0xff]
        %s256 = scalar_lea.vmem %s209, 32 [#allocation3]
        %v257 = vld [vmem:[%s256] sm:$0xff]
        %v258 = vld [vmem:[%s256 + $0x8] sm:$0xff]
        %v259 = vmul.f32 %v251, 0.299
        %v260 = vmul.f32 %v252, 0.299
        %v261 = vmul.f32 %v254, 0.587
        %v262 = vmul.f32 %v255, 0.587
        %v263 = vadd.f32 %v259, %v261
        %v264 = vadd.f32 %v260, %v262
        %v265 = vmul.f32 %v257, 0.114
        %v266 = vmul.f32 %v258, 0.114
        %v267 = vadd.f32 %v263, %v265
        %v268 = vadd.f32 %v264, %v266
        %271 = vrot.lane.b32.xlu0 %v267, 1
        %v272 = vpop.permute.xlu0 %271
        %273 = vrot.lane.b32.xlu0 %v268, 1
        %v274 = vpop.permute.xlu0 %273
        %vm277 = vcmask 138248
        %278 = vst.msk [vmem:[#allocation2 + $0x1] sm:$0xff] %vm277, %v272
        %279 = vst.msk [vmem:[#allocation2 + $0x9] sm:$0xff] %vm277, %v274
        %v280 = vld [vmem:[#allocation2 + $0x1] sm:$0xff]
        %v281 = vld [vmem:[#allocation2 + $0x9] sm:$0xff]
        %v282 = vld [vmem:[#allocation2 + $0x2] sm:$0xff]
        %v283 = vld [vmem:[#allocation2 + $0xa] sm:$0xff]
        %vm284 = vcmp.lt.s32.totalorder %v242, 15
        %285 = vrot.lane.b32.xlu0 %v267, 2
        %v286 = vpop.permute.xlu0 %285
        %287 = vrot.lane.b32.xlu0 %v268, 2
        %v288 = vpop.permute.xlu0 %287
        %v291 = vsub.f32 %v280, %v286
        %v292 = vsub.f32 %v281, %v288
        %295 = vrot.lane.b32.xlu0 %v291, 126
        %v296 = vpop.permute.xlu0 %295
        %297 = vrot.lane.b32.xlu0 %v292, 126
        %v298 = vpop.permute.xlu0 %297
        %v301 = vsel %vm284, %v296, 0.0
        %v302 = vsel %vm284, %v298, 0.0
        %vm303 = vcmp.lt.s32.totalorder %v244, 15
        %vm304 = vcmp.lt.s32.totalorder %v245, 15
        %v305 = vsub.f32 %v282, %v272
        %v306 = vsub.f32 %v283, %v274
        %v307 = vsel %vm303, %v305, 0.0
        %v308 = vsel %vm304, %v306, 0.0
        %v309 = vmul.f32 %v301, %v301
        %v310 = vmul.f32 %v302, %v302
        %v311 = vmul.f32 %v307, %v307
        %v312 = vmul.f32 %v308, %v308
        %315 = vrot.lane.b32.xlu0 %v311, 127
        %v316 = vpop.permute.xlu0 %315
        %317 = vrot.lane.b32.xlu0 %v312, 127
        %v318 = vpop.permute.xlu0 %317
        %v321 = vadd.f32 %v309, %v316
        %v322 = vadd.f32 %v310, %v318
        %v323 = vrsqrt.pop %v321
        %v324 = vmul.f32 %v321, %v323
        %vm325 = vcmp.eq.f32.partialorder %v321, inf
        %v326 = vsel %vm325, %v321, %v324
        %vm327 = vcmp.eq.f32.partialorder %v321, 0.0
        %v328 = vand.u32 %v321, 2147483648
        %v329 = vsel %vm327, %v328, %v326
        %v330 = vrsqrt.pop %v322
        %v331 = vmul.f32 %v322, %v330
        %vm332 = vcmp.eq.f32.partialorder %v322, inf
        %v333 = vsel %vm332, %v322, %v331
        %vm334 = vcmp.eq.f32.partialorder %v322, 0.0
        %v335 = vand.u32 %v322, 2147483648
        %v336 = vsel %vm334, %v335, %v333
        %v337 = vadd.f32 %v251, %v254
        %v338 = vadd.f32 %v252, %v255
        %v339 = vadd.f32 %v337, %v257
        %v340 = vadd.f32 %v338, %v258
        %v341 = vmul.f32 %v339, 0.33333334
        %v342 = vmul.f32 %v340, 0.33333334
        %v343 = vsub.f32 %v251, %v341
        %v344 = vsub.f32 %v252, %v342
        %v345 = vmul.f32 %v343, %v343
        %v346 = vmul.f32 %v344, %v344
        %v347 = vsub.f32 %v254, %v341
        %v348 = vsub.f32 %v255, %v342
        %v349 = vmul.f32 %v347, %v347
        %v350 = vmul.f32 %v348, %v348
        %v351 = vadd.f32 %v345, %v349
        %v352 = vadd.f32 %v346, %v350
        %v353 = vsub.f32 %v257, %v341
        %v354 = vsub.f32 %v258, %v342
        %v355 = vmul.f32 %v353, %v353
        %v356 = vmul.f32 %v354, %v354
        %v357 = vadd.f32 %v351, %v355
        %v358 = vadd.f32 %v352, %v356
        %v359 = vmul.f32 %v357, 0.33333334
        %v360 = vmul.f32 %v358, 0.33333334
        %v361 = vrsqrt.pop %v359
        %v362 = vmul.f32 %v359, %v361
        %vm363 = vcmp.eq.f32.partialorder %v359, inf
        %v364 = vsel %vm363, %v359, %v362
        %vm365 = vcmp.eq.f32.partialorder %v359, 0.0
        %v366 = vand.u32 %v359, 2147483648
        %v367 = vsel %vm365, %v366, %v364
        %v368 = vrsqrt.pop %v360
        %v369 = vmul.f32 %v360, %v368
        %vm370 = vcmp.eq.f32.partialorder %v360, inf
        %v371 = vsel %vm370, %v360, %v369
        %vm372 = vcmp.eq.f32.partialorder %v360, 0.0
        %v373 = vand.u32 %v360, 2147483648
        %v374 = vsel %vm372, %v373, %v371
        %v375 = vsub.f32 %v267, 0.5
        %v376 = vsub.f32 %v268, 0.5
        %v377 = vsub.f32 0.0, %v375
        %v378 = vsub.f32 0.0, %v376
        %v379 = vmul.f32 %v377, %v375
        %v380 = vmul.f32 %v378, %v376
        %v381 = vmul.f32 %v379, 12.5
        %v382 = vmul.f32 %v380, 12.5
        %v383 = vmul.f32 %v381, 1.442695
        %v384 = vpow.pop %v383
        %v385 = vmul.f32 %v382, 1.442695
        %v386 = vpow.pop %v385
        %v387 = vmul.f32 %v329, %v367
        %v388 = vmul.f32 %v336, %v374
        %v389 = vmul.f32 %v387, %v384
        %v390 = vmul.f32 %v388, %v386
        %393 = vrot.lane.b32.xlu0 %v389, 1
        %v394 = vpop.permute.xlu0 %393
        %395 = vrot.lane.b32.xlu0 %v390, 1
        %v396 = vpop.permute.xlu0 %395
        %399 = vst.msk [vmem:[#allocation2 + $0x1] sm:$0xff] %vm277, %v394
        %400 = vst.msk [vmem:[#allocation2 + $0x9] sm:$0xff] %vm277, %v396
        %vm401 = vcmask 132105
        %402 = vst.msk [vmem:[#allocation2 - $0x1] sm:$0x2] %vm401, %v394
        %vm403 = vcmask 137230
        %404 = vst.msk [vmem:[#allocation2 + $0xb] sm:$0x40] %vm403, %v396
        %v405 = vld [vmem:[#allocation2] sm:$0xff]
        %v406 = vld [vmem:[#allocation2 + $0x8] sm:$0xff]
        %v407 = vld [vmem:[#allocation2 + $0x10] sm:$0x3]
        %411 = vrot.lane.b32.xlu0 %v405, 126
        %v412 = vpop.permute.xlu0 %411
        %413 = vrot.lane.b32.xlu0 %v406, 126
        %v414 = vpop.permute.xlu0 %413
        %415 = vrot.lane.b32.xlu0 %v407, 126
        %v416 = vpop.permute.xlu0 %415
        %vm420 = vcmask 7168
        %421 = vst.msk [vmem:[#allocation2] sm:$0xff] %vm420, %v412
        %422 = vst.msk [vmem:[#allocation2 + $0x8] sm:$0xff] %vm420, %v414
        %vm423 = vcmask 1024
        %424 = vst.msk [vmem:[#allocation2 + $0x10] sm:$0x3] %vm423, %v416
        %v425 = vld [vmem:[#allocation2] sm:$0xff]
        %v426 = vld [vmem:[#allocation2 + $0x8] sm:$0xff]
        %v427 = vld [vmem:[#allocation2 + $0x10] sm:$0x3]
        %431 = vrot.lane.b32.xlu0 %v425, 2
        %v432 = vpop.permute.xlu0 %431
        %433 = vrot.lane.b32.xlu0 %v426, 2
        %v434 = vpop.permute.xlu0 %433
        %435 = vrot.lane.b32.xlu0 %v427, 2
        %v436 = vpop.permute.xlu0 %435
        %vm440 = vcmask 146568
        %441 = vst.msk [vmem:[#allocation2] sm:$0xff] %vm440, %v432
        %442 = vst.msk [vmem:[#allocation2 + $0x8] sm:$0xff] %vm440, %v434
        %vm443 = vcmask 140424
        %444 = vst.msk [vmem:[#allocation2 + $0x10] sm:$0x3] %vm443, %v436
        %v445 = vld [vmem:[#allocation2] sm:$0xff]
        %v446 = vld [vmem:[#allocation2 + $0x8] sm:$0xff]
        %s447 = sld [smem:[#allocation7]]
        %v448 = vstv %s447
        %v449 = vmul.f32 %v448, %v445
        %v450 = vmul.f32 %v448, %v446
        %s451 = sld [smem:[#allocation7 + $0x1]]
        %v452 = vstv %s451
        %v453 = vmul.f32 %v452, %v445
        %v454 = vmul.f32 %v452, %v446
        %457 = vrot.lane.b32.xlu0 %v453, 127
        %v458 = vpop.permute.xlu0 %457
        %459 = vrot.lane.b32.xlu0 %v454, 127
        %v460 = vpop.permute.xlu0 %459
        %v463 = vadd.f32 %v449, %v458
        %v464 = vadd.f32 %v450, %v460
        %s465 = sld [smem:[#allocation7 + $0x2]]
        %v466 = vstv %s465
        %v467 = vmul.f32 %v466, %v445
        %v468 = vmul.f32 %v466, %v446
        %471 = vrot.lane.b32.xlu0 %v467, 126
        %v472 = vpop.permute.xlu0 %471
        %473 = vrot.lane.b32.xlu0 %v468, 126
        %v474 = vpop.permute.xlu0 %473
        %v477 = vadd.f32 %v463, %v472
        %v478 = vadd.f32 %v464, %v474
        %v479 = vld [vmem:[#allocation2 + $0x1] sm:$0xff]
        %v480 = vld [vmem:[#allocation2 + $0x9] sm:$0xff]
        %s481 = sld [smem:[#allocation7 + $0x3]]
        %v482 = vstv %s481
        %v483 = vmul.f32 %v482, %v479
        %v484 = vmul.f32 %v482, %v480
        %v485 = vadd.f32 %v477, %v483
        %v486 = vadd.f32 %v478, %v484
        %s487 = sld [smem:[#allocation7 + $0x4]]
        %v488 = vstv %s487
        %v489 = vmul.f32 %v488, %v479
        %v490 = vmul.f32 %v488, %v480
        %493 = vrot.lane.b32.xlu0 %v489, 127
        %v494 = vpop.permute.xlu0 %493
        %495 = vrot.lane.b32.xlu0 %v490, 127
        %v496 = vpop.permute.xlu0 %495
        %v499 = vadd.f32 %v485, %v494
        %v500 = vadd.f32 %v486, %v496
        %s501 = sld [smem:[#allocation7 + $0x5]]
        %v502 = vstv %s501
        %v503 = vmul.f32 %v502, %v479
        %v504 = vmul.f32 %v502, %v480
        %507 = vrot.lane.b32.xlu0 %v503, 126
        %v508 = vpop.permute.xlu0 %507
        %509 = vrot.lane.b32.xlu0 %v504, 126
        %v510 = vpop.permute.xlu0 %509
        %v513 = vadd.f32 %v499, %v508
        %v514 = vadd.f32 %v500, %v510
        %v515 = vld [vmem:[#allocation2 + $0x2] sm:$0xff]
        %v516 = vld [vmem:[#allocation2 + $0xa] sm:$0xff]
        %s517 = sld [smem:[#allocation7 + $0x6]]
        %v518 = vstv %s517
        %v519 = vmul.f32 %v518, %v515
        %v520 = vmul.f32 %v518, %v516
        %v521 = vadd.f32 %v513, %v519
        %v522 = vadd.f32 %v514, %v520
        %s523 = sld [smem:[#allocation7 + $0x7]]
        %v524 = vstv %s523
        %v525 = vmul.f32 %v524, %v515
        %v526 = vmul.f32 %v524, %v516
        %529 = vrot.lane.b32.xlu0 %v525, 127
        %v530 = vpop.permute.xlu0 %529
        %531 = vrot.lane.b32.xlu0 %v526, 127
        %v532 = vpop.permute.xlu0 %531
        %v535 = vadd.f32 %v521, %v530
        %v536 = vadd.f32 %v522, %v532
        %s537 = sld [smem:[#allocation7 + $0x8]]
        %v538 = vstv %s537
        %v539 = vmul.f32 %v538, %v515
        %v540 = vmul.f32 %v538, %v516
        %543 = vrot.lane.b32.xlu0 %v539, 126
        %v544 = vpop.permute.xlu0 %543
        %545 = vrot.lane.b32.xlu0 %v540, 126
        %v546 = vpop.permute.xlu0 %545
        %v549 = vadd.f32 %v535, %v544
        %v550 = vadd.f32 %v536, %v546
        %s551 = sld [smem:[#allocation8]]
        %v552 = vstv %s551
        %v553 = vadd.f32 %v549, %v552
        %v554 = vadd.f32 %v550, %v552
        %s555 = scalar_lea.vmem %s209, 48 [#allocation3]
        %v556 = vld [vmem:[%s555] sm:$0xff]
        %v557 = vld [vmem:[%s555 + $0x8] sm:$0xff]
        %s558 = scalar_lea.vmem %s209, 64 [#allocation3]
        %v559 = vld [vmem:[%s558] sm:$0xff]
        %v560 = vld [vmem:[%s558 + $0x8] sm:$0xff]
        %s561 = scalar_lea.vmem %s209, 80 [#allocation3]
        %v562 = vld [vmem:[%s561] sm:$0xff]
        %v563 = vld [vmem:[%s561 + $0x8] sm:$0xff]
        %v564 = vmul.f32 %v556, 0.299
        %v565 = vmul.f32 %v557, 0.299
        %v566 = vmul.f32 %v559, 0.587
        %v567 = vmul.f32 %v560, 0.587
        %v568 = vadd.f32 %v564, %v566
        %v569 = vadd.f32 %v565, %v567
        %v570 = vmul.f32 %v562, 0.114
        %v571 = vmul.f32 %v563, 0.114
        %v572 = vadd.f32 %v568, %v570
        %v573 = vadd.f32 %v569, %v571
        %576 = vrot.lane.b32.xlu0 %v572, 1
        %v577 = vpop.permute.xlu0 %576
        %578 = vrot.lane.b32.xlu0 %v573, 1
        %v579 = vpop.permute.xlu0 %578
        %582 = vst.msk [vmem:[#allocation2 + $0x1] sm:$0xff] %vm277, %v577
        %583 = vst.msk [vmem:[#allocation2 + $0x9] sm:$0xff] %vm277, %v579
        %v584 = vld [vmem:[#allocation2 + $0x1] sm:$0xff]
        %v585 = vld [vmem:[#allocation2 + $0x9] sm:$0xff]
        %v586 = vld [vmem:[#allocation2 + $0x2] sm:$0xff]
        %v587 = vld [vmem:[#allocation2 + $0xa] sm:$0xff]
        %588 = vrot.lane.b32.xlu0 %v572, 2
        %v589 = vpop.permute.xlu0 %588
        %590 = vrot.lane.b32.xlu0 %v573, 2
        %v591 = vpop.permute.xlu0 %590
        %v594 = vsub.f32 %v584, %v589
        %v595 = vsub.f32 %v585, %v591
        %598 = vrot.lane.b32.xlu0 %v594, 126
        %v599 = vpop.permute.xlu0 %598
        %600 = vrot.lane.b32.xlu0 %v595, 126
        %v601 = vpop.permute.xlu0 %600
        %v604 = vsel %vm284, %v599, 0.0
        %v605 = vsel %vm284, %v601, 0.0
        %v606 = vsub.f32 %v586, %v577
        %v607 = vsub.f32 %v587, %v579
        %v608 = vsel %vm303, %v606, 0.0
        %v609 = vsel %vm304, %v607, 0.0
        %v610 = vmul.f32 %v604, %v604
        %v611 = vmul.f32 %v605, %v605
        %v612 = vmul.f32 %v608, %v608
        %v613 = vmul.f32 %v609, %v609
        %616 = vrot.lane.b32.xlu0 %v612, 127
        %v617 = vpop.permute.xlu0 %616
        %618 = vrot.lane.b32.xlu0 %v613, 127
        %v619 = vpop.permute.xlu0 %618
        %v622 = vadd.f32 %v610, %v617
        %v623 = vadd.f32 %v611, %v619
        %v624 = vrsqrt.pop %v622
        %v625 = vmul.f32 %v622, %v624
        %vm626 = vcmp.eq.f32.partialorder %v622, inf
        %v627 = vsel %vm626, %v622, %v625
        %vm628 = vcmp.eq.f32.partialorder %v622, 0.0
        %v629 = vand.u32 %v622, 2147483648
        %v630 = vsel %vm628, %v629, %v627
        %v631 = vrsqrt.pop %v623
        %v632 = vmul.f32 %v623, %v631
        %vm633 = vcmp.eq.f32.partialorder %v623, inf
        %v634 = vsel %vm633, %v623, %v632
        %vm635 = vcmp.eq.f32.partialorder %v623, 0.0
        %v636 = vand.u32 %v623, 2147483648
        %v637 = vsel %vm635, %v636, %v634
        %v638 = vadd.f32 %v556, %v559
        %v639 = vadd.f32 %v557, %v560
        %v640 = vadd.f32 %v638, %v562
        %v641 = vadd.f32 %v639, %v563
        %v642 = vmul.f32 %v640, 0.33333334
        %v643 = vmul.f32 %v641, 0.33333334
        %v644 = vsub.f32 %v556, %v642
        %v645 = vsub.f32 %v557, %v643
        %v646 = vmul.f32 %v644, %v644
        %v647 = vmul.f32 %v645, %v645
        %v648 = vsub.f32 %v559, %v642
        %v649 = vsub.f32 %v560, %v643
        %v650 = vmul.f32 %v648, %v648
        %v651 = vmul.f32 %v649, %v649
        %v652 = vadd.f32 %v646, %v650
        %v653 = vadd.f32 %v647, %v651
        %v654 = vsub.f32 %v562, %v642
        %v655 = vsub.f32 %v563, %v643
        %v656 = vmul.f32 %v654, %v654
        %v657 = vmul.f32 %v655, %v655
        %v658 = vadd.f32 %v652, %v656
        %v659 = vadd.f32 %v653, %v657
        %v660 = vmul.f32 %v658, 0.33333334
        %v661 = vmul.f32 %v659, 0.33333334
        %v662 = vrsqrt.pop %v660
        %v663 = vmul.f32 %v660, %v662
        %vm664 = vcmp.eq.f32.partialorder %v660, inf
        %v665 = vsel %vm664, %v660, %v663
        %vm666 = vcmp.eq.f32.partialorder %v660, 0.0
        %v667 = vand.u32 %v660, 2147483648
        %v668 = vsel %vm666, %v667, %v665
        %v669 = vrsqrt.pop %v661
        %v670 = vmul.f32 %v661, %v669
        %vm671 = vcmp.eq.f32.partialorder %v661, inf
        %v672 = vsel %vm671, %v661, %v670
        %vm673 = vcmp.eq.f32.partialorder %v661, 0.0
        %v674 = vand.u32 %v661, 2147483648
        %v675 = vsel %vm673, %v674, %v672
        %v676 = vsub.f32 %v572, 0.5
        %v677 = vsub.f32 %v573, 0.5
        %v678 = vsub.f32 0.0, %v676
        %v679 = vsub.f32 0.0, %v677
        %v680 = vmul.f32 %v678, %v676
        %v681 = vmul.f32 %v679, %v677
        %v682 = vmul.f32 %v680, 12.5
        %v683 = vmul.f32 %v681, 12.5
        %v684 = vmul.f32 %v682, 1.442695
        %v685 = vpow.pop %v684
        %v686 = vmul.f32 %v683, 1.442695
        %v687 = vpow.pop %v686
        %v688 = vmul.f32 %v630, %v668
        %v689 = vmul.f32 %v637, %v675
        %v690 = vmul.f32 %v688, %v685
        %v691 = vmul.f32 %v689, %v687
        %694 = vrot.lane.b32.xlu0 %v690, 1
        %v695 = vpop.permute.xlu0 %694
        %696 = vrot.lane.b32.xlu0 %v691, 1
        %v697 = vpop.permute.xlu0 %696
        %700 = vst.msk [vmem:[#allocation2 + $0x1] sm:$0xff] %vm277, %v695
        %701 = vst.msk [vmem:[#allocation2 + $0x9] sm:$0xff] %vm277, %v697
        %702 = vst.msk [vmem:[#allocation2 - $0x1] sm:$0x2] %vm401, %v695
        %703 = vst.msk [vmem:[#allocation2 + $0xb] sm:$0x40] %vm403, %v697
        %v704 = vld [vmem:[#allocation2] sm:$0xff]
        %v705 = vld [vmem:[#allocation2 + $0x8] sm:$0xff]
        %v706 = vld [vmem:[#allocation2 + $0x10] sm:$0x3]
        %710 = vrot.lane.b32.xlu0 %v704, 126
        %v711 = vpop.permute.xlu0 %710
        %712 = vrot.lane.b32.xlu0 %v705, 126
        %v713 = vpop.permute.xlu0 %712
        %714 = vrot.lane.b32.xlu0 %v706, 126
        %v715 = vpop.permute.xlu0 %714
        %719 = vst.msk [vmem:[#allocation2] sm:$0xff] %vm420, %v711
        %720 = vst.msk [vmem:[#allocation2 + $0x8] sm:$0xff] %vm420, %v713
        %721 = vst.msk [vmem:[#allocation2 + $0x10] sm:$0x3] %vm423, %v715
        %v722 = vld [vmem:[#allocation2] sm:$0xff]
        %v723 = vld [vmem:[#allocation2 + $0x8] sm:$0xff]
        %v724 = vld [vmem:[#allocation2 + $0x10] sm:$0x3]
        %728 = vrot.lane.b32.xlu0 %v722, 2
        %v729 = vpop.permute.xlu0 %728
        %730 = vrot.lane.b32.xlu0 %v723, 2
        %v731 = vpop.permute.xlu0 %730
        %732 = vrot.lane.b32.xlu0 %v724, 2
        %v733 = vpop.permute.xlu0 %732
        %737 = vst.msk [vmem:[#allocation2] sm:$0xff] %vm440, %v729
        %738 = vst.msk [vmem:[#allocation2 + $0x8] sm:$0xff] %vm440, %v731
        %739 = vst.msk [vmem:[#allocation2 + $0x10] sm:$0x3] %vm443, %v733
        %v740 = vld [vmem:[#allocation2] sm:$0xff]
        %v741 = vld [vmem:[#allocation2 + $0x8] sm:$0xff]
        %s742 = sld [smem:[#allocation7 + $0x9]]
        %v743 = vstv %s742
        %v744 = vmul.f32 %v743, %v740
        %v745 = vmul.f32 %v743, %v741
        %s746 = sld [smem:[#allocation7 + $0xa]]
        %v747 = vstv %s746
        %v748 = vmul.f32 %v747, %v740
        %v749 = vmul.f32 %v747, %v741
        %752 = vrot.lane.b32.xlu0 %v748, 127
        %v753 = vpop.permute.xlu0 %752
        %754 = vrot.lane.b32.xlu0 %v749, 127
        %v755 = vpop.permute.xlu0 %754
        %v758 = vadd.f32 %v744, %v753
        %v759 = vadd.f32 %v745, %v755
        %s760 = sld [smem:[#allocation7 + $0xb]]
        %v761 = vstv %s760
        %v762 = vmul.f32 %v761, %v740
        %v763 = vmul.f32 %v761, %v741
        %766 = vrot.lane.b32.xlu0 %v762, 126
        %v767 = vpop.permute.xlu0 %766
        %768 = vrot.lane.b32.xlu0 %v763, 126
        %v769 = vpop.permute.xlu0 %768
        %v772 = vadd.f32 %v758, %v767
        %v773 = vadd.f32 %v759, %v769
        %v774 = vld [vmem:[#allocation2 + $0x1] sm:$0xff]
        %v775 = vld [vmem:[#allocation2 + $0x9] sm:$0xff]
        %s776 = sld [smem:[#allocation7 + $0xc]]
        %v777 = vstv %s776
        %v778 = vmul.f32 %v777, %v774
        %v779 = vmul.f32 %v777, %v775
        %v780 = vadd.f32 %v772, %v778
        %v781 = vadd.f32 %v773, %v779
        %s782 = sld [smem:[#allocation7 + $0xd]]
        %v783 = vstv %s782
        %v784 = vmul.f32 %v783, %v774
        %v785 = vmul.f32 %v783, %v775
        %788 = vrot.lane.b32.xlu0 %v784, 127
        %v789 = vpop.permute.xlu0 %788
        %790 = vrot.lane.b32.xlu0 %v785, 127
        %v791 = vpop.permute.xlu0 %790
        %v794 = vadd.f32 %v780, %v789
        %v795 = vadd.f32 %v781, %v791
        %s796 = sld [smem:[#allocation7 + $0xe]]
        %v797 = vstv %s796
        %v798 = vmul.f32 %v797, %v774
        %v799 = vmul.f32 %v797, %v775
        %802 = vrot.lane.b32.xlu0 %v798, 126
        %v803 = vpop.permute.xlu0 %802
        %804 = vrot.lane.b32.xlu0 %v799, 126
        %v805 = vpop.permute.xlu0 %804
        %v808 = vadd.f32 %v794, %v803
        %v809 = vadd.f32 %v795, %v805
        %v810 = vld [vmem:[#allocation2 + $0x2] sm:$0xff]
        %v811 = vld [vmem:[#allocation2 + $0xa] sm:$0xff]
        %s812 = sld [smem:[#allocation7 + $0xf]]
        %v813 = vstv %s812
        %v814 = vmul.f32 %v813, %v810
        %v815 = vmul.f32 %v813, %v811
        %v816 = vadd.f32 %v808, %v814
        %v817 = vadd.f32 %v809, %v815
        %s818 = sld [smem:[#allocation7 + $0x10]]
        %v819 = vstv %s818
        %v820 = vmul.f32 %v819, %v810
        %v821 = vmul.f32 %v819, %v811
        %824 = vrot.lane.b32.xlu0 %v820, 127
        %v825 = vpop.permute.xlu0 %824
        %826 = vrot.lane.b32.xlu0 %v821, 127
        %v827 = vpop.permute.xlu0 %826
        %v830 = vadd.f32 %v816, %v825
        %v831 = vadd.f32 %v817, %v827
        %s832 = sld [smem:[#allocation7 + $0x11]]
        %v833 = vstv %s832
        %v834 = vmul.f32 %v833, %v810
        %v835 = vmul.f32 %v833, %v811
        %838 = vrot.lane.b32.xlu0 %v834, 126
        %v839 = vpop.permute.xlu0 %838
        %840 = vrot.lane.b32.xlu0 %v835, 126
        %v841 = vpop.permute.xlu0 %840
        %v844 = vadd.f32 %v830, %v839
        %v845 = vadd.f32 %v831, %v841
        %s846 = sld [smem:[#allocation8 + $0x1]]
        %v847 = vstv %s846
        %v848 = vadd.f32 %v844, %v847
        %v849 = vadd.f32 %v845, %v847
        %s850 = scalar_lea.vmem %s209, 96 [#allocation3]
        %v851 = vld [vmem:[%s850] sm:$0xff]
        %v852 = vld [vmem:[%s850 + $0x8] sm:$0xff]
        %s853 = scalar_lea.vmem %s209, 112 [#allocation3]
        %v854 = vld [vmem:[%s853] sm:$0xff]
        %v855 = vld [vmem:[%s853 + $0x8] sm:$0xff]
        %s856 = scalar_lea.vmem %s209, 128 [#allocation3]
        %v857 = vld [vmem:[%s856] sm:$0xff]
        %v858 = vld [vmem:[%s856 + $0x8] sm:$0xff]
        %v859 = vmul.f32 %v851, 0.299
        %v860 = vmul.f32 %v852, 0.299
        %v861 = vmul.f32 %v854, 0.587
        %v862 = vmul.f32 %v855, 0.587
        %v863 = vadd.f32 %v859, %v861
        %v864 = vadd.f32 %v860, %v862
        %v865 = vmul.f32 %v857, 0.114
        %v866 = vmul.f32 %v858, 0.114
        %v867 = vadd.f32 %v863, %v865
        %v868 = vadd.f32 %v864, %v866
        %871 = vrot.lane.b32.xlu0 %v867, 1
        %v872 = vpop.permute.xlu0 %871
        %873 = vrot.lane.b32.xlu0 %v868, 1
        %v874 = vpop.permute.xlu0 %873
        %877 = vst.msk [vmem:[#allocation2 + $0x1] sm:$0xff] %vm277, %v872
        %878 = vst.msk [vmem:[#allocation2 + $0x9] sm:$0xff] %vm277, %v874
        %v879 = vld [vmem:[#allocation2 + $0x1] sm:$0xff]
        %v880 = vld [vmem:[#allocation2 + $0x9] sm:$0xff]
        %v881 = vld [vmem:[#allocation2 + $0x2] sm:$0xff]
        %v882 = vld [vmem:[#allocation2 + $0xa] sm:$0xff]
        %883 = vrot.lane.b32.xlu0 %v867, 2
        %v884 = vpop.permute.xlu0 %883
        %885 = vrot.lane.b32.xlu0 %v868, 2
        %v886 = vpop.permute.xlu0 %885
        %v889 = vsub.f32 %v879, %v884
        %v890 = vsub.f32 %v880, %v886
        %893 = vrot.lane.b32.xlu0 %v889, 126
        %v894 = vpop.permute.xlu0 %893
        %895 = vrot.lane.b32.xlu0 %v890, 126
        %v896 = vpop.permute.xlu0 %895
        %v899 = vsel %vm284, %v894, 0.0
        %v900 = vsel %vm284, %v896, 0.0
        %v901 = vsub.f32 %v881, %v872
        %v902 = vsub.f32 %v882, %v874
        %v903 = vsel %vm303, %v901, 0.0
        %v904 = vsel %vm304, %v902, 0.0
        %v905 = vmul.f32 %v899, %v899
        %v906 = vmul.f32 %v900, %v900
        %v907 = vmul.f32 %v903, %v903
        %v908 = vmul.f32 %v904, %v904
        %911 = vrot.lane.b32.xlu0 %v907, 127
        %v912 = vpop.permute.xlu0 %911
        %913 = vrot.lane.b32.xlu0 %v908, 127
        %v914 = vpop.permute.xlu0 %913
        %v917 = vadd.f32 %v905, %v912
        %v918 = vadd.f32 %v906, %v914
        %v919 = vrsqrt.pop %v917
        %v920 = vmul.f32 %v917, %v919
        %vm921 = vcmp.eq.f32.partialorder %v917, inf
        %v922 = vsel %vm921, %v917, %v920
        %vm923 = vcmp.eq.f32.partialorder %v917, 0.0
        %v924 = vand.u32 %v917, 2147483648
        %v925 = vsel %vm923, %v924, %v922
        %v926 = vrsqrt.pop %v918
        %v927 = vmul.f32 %v918, %v926
        %vm928 = vcmp.eq.f32.partialorder %v918, inf
        %v929 = vsel %vm928, %v918, %v927
        %vm930 = vcmp.eq.f32.partialorder %v918, 0.0
        %v931 = vand.u32 %v918, 2147483648
        %v932 = vsel %vm930, %v931, %v929
        %v933 = vadd.f32 %v851, %v854
        %v934 = vadd.f32 %v852, %v855
        %v935 = vadd.f32 %v933, %v857
        %v936 = vadd.f32 %v934, %v858
        %v937 = vmul.f32 %v935, 0.33333334
        %v938 = vmul.f32 %v936, 0.33333334
        %v939 = vsub.f32 %v851, %v937
        %v940 = vsub.f32 %v852, %v938
        %v941 = vmul.f32 %v939, %v939
        %v942 = vmul.f32 %v940, %v940
        %v943 = vsub.f32 %v854, %v937
        %v944 = vsub.f32 %v855, %v938
        %v945 = vmul.f32 %v943, %v943
        %v946 = vmul.f32 %v944, %v944
        %v947 = vadd.f32 %v941, %v945
        %v948 = vadd.f32 %v942, %v946
        %v949 = vsub.f32 %v857, %v937
        %v950 = vsub.f32 %v858, %v938
        %v951 = vmul.f32 %v949, %v949
        %v952 = vmul.f32 %v950, %v950
        %v953 = vadd.f32 %v947, %v951
        %v954 = vadd.f32 %v948, %v952
        %v955 = vmul.f32 %v953, 0.33333334
        %v956 = vmul.f32 %v954, 0.33333334
        %v957 = vrsqrt.pop %v955
        %v958 = vmul.f32 %v955, %v957
        %vm959 = vcmp.eq.f32.partialorder %v955, inf
        %v960 = vsel %vm959, %v955, %v958
        %vm961 = vcmp.eq.f32.partialorder %v955, 0.0
        %v962 = vand.u32 %v955, 2147483648
        %v963 = vsel %vm961, %v962, %v960
        %v964 = vrsqrt.pop %v956
        %v965 = vmul.f32 %v956, %v964
        %vm966 = vcmp.eq.f32.partialorder %v956, inf
        %v967 = vsel %vm966, %v956, %v965
        %vm968 = vcmp.eq.f32.partialorder %v956, 0.0
        %v969 = vand.u32 %v956, 2147483648
        %v970 = vsel %vm968, %v969, %v967
        %v971 = vsub.f32 %v867, 0.5
        %v972 = vsub.f32 %v868, 0.5
        %v973 = vsub.f32 0.0, %v971
        %v974 = vsub.f32 0.0, %v972
        %v975 = vmul.f32 %v973, %v971
        %v976 = vmul.f32 %v974, %v972
        %v977 = vmul.f32 %v975, 12.5
        %v978 = vmul.f32 %v976, 12.5
        %v979 = vmul.f32 %v977, 1.442695
        %v980 = vpow.pop %v979
        %v981 = vmul.f32 %v978, 1.442695
        %v982 = vpow.pop %v981
        %v983 = vmul.f32 %v925, %v963
        %v984 = vmul.f32 %v932, %v970
        %v985 = vmul.f32 %v983, %v980
        %v986 = vmul.f32 %v984, %v982
        %989 = vrot.lane.b32.xlu0 %v985, 1
        %v990 = vpop.permute.xlu0 %989
        %991 = vrot.lane.b32.xlu0 %v986, 1
        %v992 = vpop.permute.xlu0 %991
        %995 = vst.msk [vmem:[#allocation2 + $0x1] sm:$0xff] %vm277, %v990
        %996 = vst.msk [vmem:[#allocation2 + $0x9] sm:$0xff] %vm277, %v992
        %997 = vst.msk [vmem:[#allocation2 - $0x1] sm:$0x2] %vm401, %v990
        %998 = vst.msk [vmem:[#allocation2 + $0xb] sm:$0x40] %vm403, %v992
        %v999 = vld [vmem:[#allocation2] sm:$0xff]
        %v1000 = vld [vmem:[#allocation2 + $0x8] sm:$0xff]
        %v1001 = vld [vmem:[#allocation2 + $0x10] sm:$0x3]
        %1005 = vrot.lane.b32.xlu0 %v999, 126
        %v1006 = vpop.permute.xlu0 %1005
        %1007 = vrot.lane.b32.xlu0 %v1000, 126
        %v1008 = vpop.permute.xlu0 %1007
        %1009 = vrot.lane.b32.xlu0 %v1001, 126
        %v1010 = vpop.permute.xlu0 %1009
        %1014 = vst.msk [vmem:[#allocation2] sm:$0xff] %vm420, %v1006
        %1015 = vst.msk [vmem:[#allocation2 + $0x8] sm:$0xff] %vm420, %v1008
        %1016 = vst.msk [vmem:[#allocation2 + $0x10] sm:$0x3] %vm423, %v1010
        %v1017 = vld [vmem:[#allocation2] sm:$0xff]
        %v1018 = vld [vmem:[#allocation2 + $0x8] sm:$0xff]
        %v1019 = vld [vmem:[#allocation2 + $0x10] sm:$0x3]
        %1023 = vrot.lane.b32.xlu0 %v1017, 2
        %v1024 = vpop.permute.xlu0 %1023
        %1025 = vrot.lane.b32.xlu0 %v1018, 2
        %v1026 = vpop.permute.xlu0 %1025
        %1027 = vrot.lane.b32.xlu0 %v1019, 2
        %v1028 = vpop.permute.xlu0 %1027
        %1032 = vst.msk [vmem:[#allocation2] sm:$0xff] %vm440, %v1024
        %1033 = vst.msk [vmem:[#allocation2 + $0x8] sm:$0xff] %vm440, %v1026
        %1034 = vst.msk [vmem:[#allocation2 + $0x10] sm:$0x3] %vm443, %v1028
        %v1035 = vld [vmem:[#allocation2] sm:$0xff]
        %v1036 = vld [vmem:[#allocation2 + $0x8] sm:$0xff]
        %s1037 = sld [smem:[#allocation7 + $0x12]]
        %v1038 = vstv %s1037
        %v1039 = vmul.f32 %v1038, %v1035
        %v1040 = vmul.f32 %v1038, %v1036
        %s1041 = sld [smem:[#allocation7 + $0x13]]
        %v1042 = vstv %s1041
        %v1043 = vmul.f32 %v1042, %v1035
        %v1044 = vmul.f32 %v1042, %v1036
        %1047 = vrot.lane.b32.xlu0 %v1043, 127
        %v1048 = vpop.permute.xlu0 %1047
        %1049 = vrot.lane.b32.xlu0 %v1044, 127
        %v1050 = vpop.permute.xlu0 %1049
        %v1053 = vadd.f32 %v1039, %v1048
        %v1054 = vadd.f32 %v1040, %v1050
        %s1055 = sld [smem:[#allocation7 + $0x14]]
        %v1056 = vstv %s1055
        %v1057 = vmul.f32 %v1056, %v1035
        %v1058 = vmul.f32 %v1056, %v1036
        %1061 = vrot.lane.b32.xlu0 %v1057, 126
        %v1062 = vpop.permute.xlu0 %1061
        %1063 = vrot.lane.b32.xlu0 %v1058, 126
        %v1064 = vpop.permute.xlu0 %1063
        %v1067 = vadd.f32 %v1053, %v1062
        %v1068 = vadd.f32 %v1054, %v1064
        %v1069 = vld [vmem:[#allocation2 + $0x1] sm:$0xff]
        %v1070 = vld [vmem:[#allocation2 + $0x9] sm:$0xff]
        %s1071 = sld [smem:[#allocation7 + $0x15]]
        %v1072 = vstv %s1071
        %v1073 = vmul.f32 %v1072, %v1069
        %v1074 = vmul.f32 %v1072, %v1070
        %v1075 = vadd.f32 %v1067, %v1073
        %v1076 = vadd.f32 %v1068, %v1074
        %s1077 = sld [smem:[#allocation7 + $0x16]]
        %v1078 = vstv %s1077
        %v1079 = vmul.f32 %v1078, %v1069
        %v1080 = vmul.f32 %v1078, %v1070
        %1083 = vrot.lane.b32.xlu0 %v1079, 127
        %v1084 = vpop.permute.xlu0 %1083
        %1085 = vrot.lane.b32.xlu0 %v1080, 127
        %v1086 = vpop.permute.xlu0 %1085
        %v1089 = vadd.f32 %v1075, %v1084
        %v1090 = vadd.f32 %v1076, %v1086
        %s1091 = sld [smem:[#allocation7 + $0x17]]
        %v1092 = vstv %s1091
        %v1093 = vmul.f32 %v1092, %v1069
        %v1094 = vmul.f32 %v1092, %v1070
        %1097 = vrot.lane.b32.xlu0 %v1093, 126
        %v1098 = vpop.permute.xlu0 %1097
        %1099 = vrot.lane.b32.xlu0 %v1094, 126
        %v1100 = vpop.permute.xlu0 %1099
        %v1103 = vadd.f32 %v1089, %v1098
        %v1104 = vadd.f32 %v1090, %v1100
        %v1105 = vld [vmem:[#allocation2 + $0x2] sm:$0xff]
        %v1106 = vld [vmem:[#allocation2 + $0xa] sm:$0xff]
        %s1107 = sld [smem:[#allocation7 + $0x18]]
        %v1108 = vstv %s1107
        %v1109 = vmul.f32 %v1108, %v1105
        %v1110 = vmul.f32 %v1108, %v1106
        %v1111 = vadd.f32 %v1103, %v1109
        %v1112 = vadd.f32 %v1104, %v1110
        %s1113 = sld [smem:[#allocation7 + $0x19]]
        %v1114 = vstv %s1113
        %v1115 = vmul.f32 %v1114, %v1105
        %v1116 = vmul.f32 %v1114, %v1106
        %1119 = vrot.lane.b32.xlu0 %v1115, 127
        %v1120 = vpop.permute.xlu0 %1119
        %1121 = vrot.lane.b32.xlu0 %v1116, 127
        %v1122 = vpop.permute.xlu0 %1121
        %v1125 = vadd.f32 %v1111, %v1120
        %v1126 = vadd.f32 %v1112, %v1122
        %s1127 = sld [smem:[#allocation7 + $0x1a]]
        %v1128 = vstv %s1127
        %v1129 = vmul.f32 %v1128, %v1105
        %v1130 = vmul.f32 %v1128, %v1106
        %1133 = vrot.lane.b32.xlu0 %v1129, 126
        %v1134 = vpop.permute.xlu0 %1133
        %1135 = vrot.lane.b32.xlu0 %v1130, 126
        %v1136 = vpop.permute.xlu0 %1135
        %v1139 = vadd.f32 %v1125, %v1134
        %v1140 = vadd.f32 %v1126, %v1136
        %s1141 = sld [smem:[#allocation8 + $0x2]]
        %v1142 = vstv %s1141
        %v1143 = vadd.f32 %v1139, %v1142
        %v1144 = vadd.f32 %v1140, %v1142
        %s1145 = scalar_lea.vmem %s209, 144 [#allocation3]
        %v1146 = vld [vmem:[%s1145] sm:$0xff]
        %v1147 = vld [vmem:[%s1145 + $0x8] sm:$0xff]
        %s1148 = scalar_lea.vmem %s209, 160 [#allocation3]
        %v1149 = vld [vmem:[%s1148] sm:$0xff]
        %v1150 = vld [vmem:[%s1148 + $0x8] sm:$0xff]
        %s1151 = scalar_lea.vmem %s209, 176 [#allocation3]
        %v1152 = vld [vmem:[%s1151] sm:$0xff]
        %v1153 = vld [vmem:[%s1151 + $0x8] sm:$0xff]
        %v1154 = vmul.f32 %v1146, 0.299
        %v1155 = vmul.f32 %v1147, 0.299
        %v1156 = vmul.f32 %v1149, 0.587
        %v1157 = vmul.f32 %v1150, 0.587
        %v1158 = vadd.f32 %v1154, %v1156
        %v1159 = vadd.f32 %v1155, %v1157
        %v1160 = vmul.f32 %v1152, 0.114
        %v1161 = vmul.f32 %v1153, 0.114
        %v1162 = vadd.f32 %v1158, %v1160
        %v1163 = vadd.f32 %v1159, %v1161
        %1166 = vrot.lane.b32.xlu0 %v1162, 1
        %v1167 = vpop.permute.xlu0 %1166
        %1168 = vrot.lane.b32.xlu0 %v1163, 1
        %v1169 = vpop.permute.xlu0 %1168
        %1172 = vst.msk [vmem:[#allocation2 + $0x1] sm:$0xff] %vm277, %v1167
        %1173 = vst.msk [vmem:[#allocation2 + $0x9] sm:$0xff] %vm277, %v1169
        %v1174 = vld [vmem:[#allocation2 + $0x1] sm:$0xff]
        %v1175 = vld [vmem:[#allocation2 + $0x9] sm:$0xff]
        %v1176 = vld [vmem:[#allocation2 + $0x2] sm:$0xff]
        %v1177 = vld [vmem:[#allocation2 + $0xa] sm:$0xff]
        %1178 = vrot.lane.b32.xlu0 %v1162, 2
        %v1179 = vpop.permute.xlu0 %1178
        %1180 = vrot.lane.b32.xlu0 %v1163, 2
        %v1181 = vpop.permute.xlu0 %1180
        %v1184 = vsub.f32 %v1174, %v1179
        %v1185 = vsub.f32 %v1175, %v1181
        %1188 = vrot.lane.b32.xlu0 %v1184, 126
        %v1189 = vpop.permute.xlu0 %1188
        %1190 = vrot.lane.b32.xlu0 %v1185, 126
        %v1191 = vpop.permute.xlu0 %1190
        %v1194 = vsel %vm284, %v1189, 0.0
        %v1195 = vsel %vm284, %v1191, 0.0
        %v1196 = vsub.f32 %v1176, %v1167
        %v1197 = vsub.f32 %v1177, %v1169
        %v1198 = vsel %vm303, %v1196, 0.0
        %v1199 = vsel %vm304, %v1197, 0.0
        %v1200 = vmul.f32 %v1194, %v1194
        %v1201 = vmul.f32 %v1195, %v1195
        %v1202 = vmul.f32 %v1198, %v1198
        %v1203 = vmul.f32 %v1199, %v1199
        %1206 = vrot.lane.b32.xlu0 %v1202, 127
        %v1207 = vpop.permute.xlu0 %1206
        %1208 = vrot.lane.b32.xlu0 %v1203, 127
        %v1209 = vpop.permute.xlu0 %1208
        %v1212 = vadd.f32 %v1200, %v1207
        %v1213 = vadd.f32 %v1201, %v1209
        %v1214 = vrsqrt.pop %v1212
        %v1215 = vmul.f32 %v1212, %v1214
        %vm1216 = vcmp.eq.f32.partialorder %v1212, inf
        %v1217 = vsel %vm1216, %v1212, %v1215
        %vm1218 = vcmp.eq.f32.partialorder %v1212, 0.0
        %v1219 = vand.u32 %v1212, 2147483648
        %v1220 = vsel %vm1218, %v1219, %v1217
        %v1221 = vrsqrt.pop %v1213
        %v1222 = vmul.f32 %v1213, %v1221
        %vm1223 = vcmp.eq.f32.partialorder %v1213, inf
        %v1224 = vsel %vm1223, %v1213, %v1222
        %vm1225 = vcmp.eq.f32.partialorder %v1213, 0.0
        %v1226 = vand.u32 %v1213, 2147483648
        %v1227 = vsel %vm1225, %v1226, %v1224
        %v1228 = vadd.f32 %v1146, %v1149
        %v1229 = vadd.f32 %v1147, %v1150
        %v1230 = vadd.f32 %v1228, %v1152
        %v1231 = vadd.f32 %v1229, %v1153
        %v1232 = vmul.f32 %v1230, 0.33333334
        %v1233 = vmul.f32 %v1231, 0.33333334
        %v1234 = vsub.f32 %v1146, %v1232
        %v1235 = vsub.f32 %v1147, %v1233
        %v1236 = vmul.f32 %v1234, %v1234
        %v1237 = vmul.f32 %v1235, %v1235
        %v1238 = vsub.f32 %v1149, %v1232
        %v1239 = vsub.f32 %v1150, %v1233
        %v1240 = vmul.f32 %v1238, %v1238
        %v1241 = vmul.f32 %v1239, %v1239
        %v1242 = vadd.f32 %v1236, %v1240
        %v1243 = vadd.f32 %v1237, %v1241
        %v1244 = vsub.f32 %v1152, %v1232
        %v1245 = vsub.f32 %v1153, %v1233
        %v1246 = vmul.f32 %v1244, %v1244
        %v1247 = vmul.f32 %v1245, %v1245
        %v1248 = vadd.f32 %v1242, %v1246
        %v1249 = vadd.f32 %v1243, %v1247
        %v1250 = vmul.f32 %v1248, 0.33333334
        %v1251 = vmul.f32 %v1249, 0.33333334
        %v1252 = vrsqrt.pop %v1250
        %v1253 = vmul.f32 %v1250, %v1252
        %vm1254 = vcmp.eq.f32.partialorder %v1250, inf
        %v1255 = vsel %vm1254, %v1250, %v1253
        %vm1256 = vcmp.eq.f32.partialorder %v1250, 0.0
        %v1257 = vand.u32 %v1250, 2147483648
        %v1258 = vsel %vm1256, %v1257, %v1255
        %v1259 = vrsqrt.pop %v1251
        %v1260 = vmul.f32 %v1251, %v1259
        %vm1261 = vcmp.eq.f32.partialorder %v1251, inf
        %v1262 = vsel %vm1261, %v1251, %v1260
        %vm1263 = vcmp.eq.f32.partialorder %v1251, 0.0
        %v1264 = vand.u32 %v1251, 2147483648
        %v1265 = vsel %vm1263, %v1264, %v1262
        %v1266 = vsub.f32 %v1162, 0.5
        %v1267 = vsub.f32 %v1163, 0.5
        %v1268 = vsub.f32 0.0, %v1266
        %v1269 = vsub.f32 0.0, %v1267
        %v1270 = vmul.f32 %v1268, %v1266
        %v1271 = vmul.f32 %v1269, %v1267
        %v1272 = vmul.f32 %v1270, 12.5
        %v1273 = vmul.f32 %v1271, 12.5
        %v1274 = vmul.f32 %v1272, 1.442695
        %v1275 = vpow.pop %v1274
        %v1276 = vmul.f32 %v1273, 1.442695
        %v1277 = vpow.pop %v1276
        %v1278 = vmul.f32 %v1220, %v1258
        %v1279 = vmul.f32 %v1227, %v1265
        %v1280 = vmul.f32 %v1278, %v1275
        %v1281 = vmul.f32 %v1279, %v1277
        %1284 = vrot.lane.b32.xlu0 %v1280, 1
        %v1285 = vpop.permute.xlu0 %1284
        %1286 = vrot.lane.b32.xlu0 %v1281, 1
        %v1287 = vpop.permute.xlu0 %1286
        %1290 = vst.msk [vmem:[#allocation2 + $0x1] sm:$0xff] %vm277, %v1285
        %1291 = vst.msk [vmem:[#allocation2 + $0x9] sm:$0xff] %vm277, %v1287
        %1292 = vst.msk [vmem:[#allocation2 - $0x1] sm:$0x2] %vm401, %v1285
        %1293 = vst.msk [vmem:[#allocation2 + $0xb] sm:$0x40] %vm403, %v1287
        %v1294 = vld [vmem:[#allocation2] sm:$0xff]
        %v1295 = vld [vmem:[#allocation2 + $0x8] sm:$0xff]
        %v1296 = vld [vmem:[#allocation2 + $0x10] sm:$0x3]
        %1300 = vrot.lane.b32.xlu0 %v1294, 126
        %v1301 = vpop.permute.xlu0 %1300
        %1302 = vrot.lane.b32.xlu0 %v1295, 126
        %v1303 = vpop.permute.xlu0 %1302
        %1304 = vrot.lane.b32.xlu0 %v1296, 126
        %v1305 = vpop.permute.xlu0 %1304
        %1309 = vst.msk [vmem:[#allocation2] sm:$0xff] %vm420, %v1301
        %1310 = vst.msk [vmem:[#allocation2 + $0x8] sm:$0xff] %vm420, %v1303
        %1311 = vst.msk [vmem:[#allocation2 + $0x10] sm:$0x3] %vm423, %v1305
        %v1312 = vld [vmem:[#allocation2] sm:$0xff]
        %v1313 = vld [vmem:[#allocation2 + $0x8] sm:$0xff]
        %v1314 = vld [vmem:[#allocation2 + $0x10] sm:$0x3]
        %1318 = vrot.lane.b32.xlu0 %v1312, 2
        %v1319 = vpop.permute.xlu0 %1318
        %1320 = vrot.lane.b32.xlu0 %v1313, 2
        %v1321 = vpop.permute.xlu0 %1320
        %1322 = vrot.lane.b32.xlu0 %v1314, 2
        %v1323 = vpop.permute.xlu0 %1322
        %1327 = vst.msk [vmem:[#allocation2] sm:$0xff] %vm440, %v1319
        %1328 = vst.msk [vmem:[#allocation2 + $0x8] sm:$0xff] %vm440, %v1321
        %1329 = vst.msk [vmem:[#allocation2 + $0x10] sm:$0x3] %vm443, %v1323
        %v1330 = vld [vmem:[#allocation2] sm:$0xff]
        %v1331 = vld [vmem:[#allocation2 + $0x8] sm:$0xff]
        %s1332 = sld [smem:[#allocation7 + $0x1b]]
        %v1333 = vstv %s1332
        %v1334 = vmul.f32 %v1333, %v1330
        %v1335 = vmul.f32 %v1333, %v1331
        %s1336 = sld [smem:[#allocation7 + $0x1c]]
        %v1337 = vstv %s1336
        %v1338 = vmul.f32 %v1337, %v1330
        %v1339 = vmul.f32 %v1337, %v1331
        %1342 = vrot.lane.b32.xlu0 %v1338, 127
        %v1343 = vpop.permute.xlu0 %1342
        %1344 = vrot.lane.b32.xlu0 %v1339, 127
        %v1345 = vpop.permute.xlu0 %1344
        %v1348 = vadd.f32 %v1334, %v1343
        %v1349 = vadd.f32 %v1335, %v1345
        %s1350 = sld [smem:[#allocation7 + $0x1d]]
        %v1351 = vstv %s1350
        %v1352 = vmul.f32 %v1351, %v1330
        %v1353 = vmul.f32 %v1351, %v1331
        %1356 = vrot.lane.b32.xlu0 %v1352, 126
        %v1357 = vpop.permute.xlu0 %1356
        %1358 = vrot.lane.b32.xlu0 %v1353, 126
        %v1359 = vpop.permute.xlu0 %1358
        %v1362 = vadd.f32 %v1348, %v1357
        %v1363 = vadd.f32 %v1349, %v1359
        %v1364 = vld [vmem:[#allocation2 + $0x1] sm:$0xff]
        %v1365 = vld [vmem:[#allocation2 + $0x9] sm:$0xff]
        %s1366 = sld [smem:[#allocation7 + $0x1e]]
        %v1367 = vstv %s1366
        %v1368 = vmul.f32 %v1367, %v1364
        %v1369 = vmul.f32 %v1367, %v1365
        %v1370 = vadd.f32 %v1362, %v1368
        %v1371 = vadd.f32 %v1363, %v1369
        %s1372 = sld [smem:[#allocation7 + $0x1f]]
        %v1373 = vstv %s1372
        %v1374 = vmul.f32 %v1373, %v1364
        %v1375 = vmul.f32 %v1373, %v1365
        %1378 = vrot.lane.b32.xlu0 %v1374, 127
        %v1379 = vpop.permute.xlu0 %1378
        %1380 = vrot.lane.b32.xlu0 %v1375, 127
        %v1381 = vpop.permute.xlu0 %1380
        %v1384 = vadd.f32 %v1370, %v1379
        %v1385 = vadd.f32 %v1371, %v1381
        %s1386 = sld [smem:[#allocation7 + $0x20]]
        %v1387 = vstv %s1386
        %v1388 = vmul.f32 %v1387, %v1364
        %v1389 = vmul.f32 %v1387, %v1365
        %1392 = vrot.lane.b32.xlu0 %v1388, 126
        %v1393 = vpop.permute.xlu0 %1392
        %1394 = vrot.lane.b32.xlu0 %v1389, 126
        %v1395 = vpop.permute.xlu0 %1394
        %v1398 = vadd.f32 %v1384, %v1393
        %v1399 = vadd.f32 %v1385, %v1395
        %v1400 = vld [vmem:[#allocation2 + $0x2] sm:$0xff]
        %v1401 = vld [vmem:[#allocation2 + $0xa] sm:$0xff]
        %s1402 = sld [smem:[#allocation7 + $0x21]]
        %v1403 = vstv %s1402
        %v1404 = vmul.f32 %v1403, %v1400
        %v1405 = vmul.f32 %v1403, %v1401
        %v1406 = vadd.f32 %v1398, %v1404
        %v1407 = vadd.f32 %v1399, %v1405
        %s1408 = sld [smem:[#allocation7 + $0x22]]
        %v1409 = vstv %s1408
        %v1410 = vmul.f32 %v1409, %v1400
        %v1411 = vmul.f32 %v1409, %v1401
        %1414 = vrot.lane.b32.xlu0 %v1410, 127
        %v1415 = vpop.permute.xlu0 %1414
        %1416 = vrot.lane.b32.xlu0 %v1411, 127
        %v1417 = vpop.permute.xlu0 %1416
        %v1420 = vadd.f32 %v1406, %v1415
        %v1421 = vadd.f32 %v1407, %v1417
        %s1422 = sld [smem:[#allocation7 + $0x23]]
        %v1423 = vstv %s1422
        %v1424 = vmul.f32 %v1423, %v1400
        %v1425 = vmul.f32 %v1423, %v1401
        %1428 = vrot.lane.b32.xlu0 %v1424, 126
        %v1429 = vpop.permute.xlu0 %1428
        %1430 = vrot.lane.b32.xlu0 %v1425, 126
        %v1431 = vpop.permute.xlu0 %1430
        %v1434 = vadd.f32 %v1420, %v1429
        %v1435 = vadd.f32 %v1421, %v1431
        %s1436 = sld [smem:[#allocation8 + $0x3]]
        %v1437 = vstv %s1436
        %v1438 = vadd.f32 %v1434, %v1437
        %v1439 = vadd.f32 %v1435, %v1437
        %v1440 = vmax.f32 %v553, %v848
        %v1441 = vmax.f32 %v554, %v849
        %v1442 = vmax.f32 %v1440, %v1143
        %v1443 = vmax.f32 %v1441, %v1144
        %v1444 = vmax.f32 %v1442, %v1438
        %v1445 = vmax.f32 %v1443, %v1439
        %v1446 = vsub.f32 %v553, %v1444
        %v1447 = vsub.f32 %v554, %v1445
        %v1448 = vmul.f32 %v1446, 1.442695
        %v1449 = vpow.pop %v1448
        %v1450 = vmul.f32 %v1447, 1.442695
        %v1451 = vpow.pop %v1450
        %v1452 = vsub.f32 %v848, %v1444
        %v1453 = vsub.f32 %v849, %v1445
        %v1454 = vmul.f32 %v1452, 1.442695
        %v1455 = vpow.pop %v1454
        %v1456 = vmul.f32 %v1453, 1.442695
        %v1457 = vpow.pop %v1456
        %v1458 = vsub.f32 %v1143, %v1444
        %v1459 = vsub.f32 %v1144, %v1445
        %v1460 = vmul.f32 %v1458, 1.442695
        %v1461 = vpow.pop %v1460
        %v1462 = vmul.f32 %v1459, 1.442695
        %v1463 = vpow.pop %v1462
        %v1464 = vsub.f32 %v1438, %v1444
        %v1465 = vsub.f32 %v1439, %v1445
        %v1466 = vmul.f32 %v1464, 1.442695
        %v1467 = vpow.pop %v1466
        %v1468 = vmul.f32 %v1465, 1.442695
        %v1469 = vpow.pop %v1468
        %v1470 = vadd.f32 %v1449, %v1455
        %v1471 = vadd.f32 %v1451, %v1457
        %v1472 = vadd.f32 %v1470, %v1461
        %v1473 = vadd.f32 %v1471, %v1463
        %v1474 = vadd.f32 %v1472, %v1467
        %v1475 = vadd.f32 %v1473, %v1469
        %v1476 = vrcp.pop %v1474
        %v1477 = vmul.f32 1.0, %v1476
        %v1478 = vrcp.pop %v1475
        %v1479 = vmul.f32 1.0, %v1478
        %v1480 = vmul.f32 %v1449, %v1477
        %v1481 = vmul.f32 %v1451, %v1479
        %vm1482 = vcmask 130048
        %1483 = vst.msk [vmem:[%s240] sm:$0xff] %vm1482, %v1480
        %1484 = vst.msk [vmem:[%s240 + $0x8] sm:$0xff] %vm1482, %v1481
        %v1485 = vmul.f32 %v1455, %v1477
        %v1486 = vmul.f32 %v1457, %v1479
        %s1487 = scalar_lea.vmem %s240, 16 [#allocation10]
        %1488 = vst.msk [vmem:[%s1487] sm:$0xff] %vm1482, %v1485
        %1489 = vst.msk [vmem:[%s1487 + $0x8] sm:$0xff] %vm1482, %v1486
        %v1490 = vmul.f32 %v1461, %v1477
        %v1491 = vmul.f32 %v1463, %v1479
        %s1492 = scalar_lea.vmem %s240, 32 [#allocation10]
        %1493 = vst.msk [vmem:[%s1492] sm:$0xff] %vm1482, %v1490
        %1494 = vst.msk [vmem:[%s1492 + $0x8] sm:$0xff] %vm1482, %v1491
        %v1495 = vmul.f32 %v1467, %v1477
        %v1496 = vmul.f32 %v1469, %v1479
        %s1497 = scalar_lea.vmem %s240, 48 [#allocation10]
        %1498 = vst.msk [vmem:[%s1497] sm:$0xff] %vm1482, %v1495
        %1499 = vst.msk [vmem:[%s1497 + $0x8] sm:$0xff] %vm1482, %v1496
        %s1500 = sand.u32 %s98, 1
        %s1501 = scalar_lea.sflag [#allocation5], %s1500
        %s1502 = sand.u32 %s98, 1
        %s1503 = smul.addr %s1502, 64
        %s1504 = scalar_lea.vmem [#allocation10], %s1503
        // Predicated region
        $region45: #{tpu_custom_call.1} parent=31 // pred_check
          %p1505 = pneg %p108
        $region46: #{tpu_custom_call.1} parent=31 // pred_check_branch
          %1507 = sbr.rel (%p1505) target = $region48
        $region47: #{tpu_custom_call.1} parent=31 // pred_region
          %s1509 = ssub.s32 1024, 1024
          %1510 = vsyncadd %s1501, %s1509
          %s1511 = smul.addr %s22, 8
          %s1512 = smul.addr %s1511, 128
          %s1513 = scalar_lea.hbm %s3, %s1512
          %s1514 = sshll.u32 %s1504, 4
          %s1515 = int_to_ptr.vmem [resolvable:$true] %s1514
          %1520 = dma.vmem_to_hbm [thread:$0]  %s1515, 1024, %s1513, %s1501, 128, 128, 8
        $region48: #{tpu_custom_call.1} parent=31 // pred_fallthru
          _
      $region32: #{tpu_custom_call.1} parent=5 // pred_fallthru
        _
      %p1521 = scmp.le.s32.totalorder 2, %s17
      // Predicated region
      $region49: #{tpu_custom_call.1} parent=5 // pred_check
        %p1522 = pneg %p1521
      $region50: #{tpu_custom_call.1} parent=5 // pred_check_branch
        %1524 = sbr.rel (%p1522) target = $region52
      $region51: #{tpu_custom_call.1} parent=5 // pred_region
        %s1525 = ssub.s32 %s17, 2
        // Predicated region
        $region53: #{tpu_custom_call.1} parent=51 // pred_check
          %p1526 = pneg %p114
        $region54: #{tpu_custom_call.1} parent=51 // pred_check_branch
          %1528 = sbr.rel (%p1526) target = $region56
        $region55: #{tpu_custom_call.1} parent=51 // pred_region
          %s1529 = sand.u32 %s99, 1
          %s1530 = scalar_lea.sflag [#allocation5], %s1529
          %s1531 = sand.u32 %s99, 1
          %s1532 = smul.addr %s1531, 64
          %s1533 = scalar_lea.vmem [#allocation10], %s1532
          %1534 = dma.done %s1530, 1024
        $region56: #{tpu_custom_call.1} parent=51 // pred_fallthru
          _
      $region52: #{tpu_custom_call.1} parent=5 // pred_fallthru
        _
    $region6: #{tpu_custom_call.1} parent=1 // loop_footer
      %s21 = sadd.s32 1, %s17
    $region7: #{tpu_custom_call.1} parent=1 // loop_footer_branch
      %16 = sbr.rel target = $region3
    $region8: #{tpu_custom_call.1} parent=1 // loop_exit
      _
    %1535 = vsyncpa [#allocation4], 1
    %s1536 = scalar_lea.sflag [#allocation4], 1
    %1537 = vsyncpa %s1536, 1
    %1538 = vsyncpa [#allocation5], 1
    %s1539 = scalar_lea.sflag [#allocation5], 1
    %1540 = vsyncpa %s1539, 1
    %1541 = vsyncpa [#allocation6], 1
    %s1542 = scalar_lea.sflag [#allocation6], 1
    %1543 = vsyncpa %s1542, 1
    %1544 = vsyncpa [#allocation9], 1

</llo_original>
